<compile_context>
chip_gen: v7x
topology: tpu7x:2x2x1
jax: 0.10.0
libtpu: 0.0.40
codegen_flags: <defaults>
</compile_context>

<pallas_src>
import numpy as np
import jax
import jax.numpy as jnp
from jax.experimental import pallas as pl
from jax.experimental.pallas import tpu as pltpu

P = 128  # padded lane width of the LSTM/fc stage (== 4 * lstm_hidden here)


def _full_spec(shape):
    # whole-array block, empty grid -> index_map takes no args
    return pl.BlockSpec(shape, lambda: (0,) * len(shape))


def _round_up(n, m):
    return ((n + m - 1) // m) * m


def make_layout(num_lstm_layers):
    """Static row offsets of every parameter block inside the 128-lane LSTM/fc slab."""
    off = 0
    convb = off; off += 8                       # conv biases (one row used)
    lstm = []
    for _ in range(num_lstm_layers):
        wih = off; off += P                     # (P,P) zero-padded Wih^T
        whh = off; off += P                     # (P,P) zero-padded Whh^T
        b = off; off += 8                       # combined bih+bhh row
        lstm.append((wih, whh, b))
    wfc = off; off += P                         # (P,P) zero-padded Wfc^T
    bfc = off; off += 8                         # fc bias row (pad lanes = -1e9)
    return {"convb": convb, "lstm": lstm, "wfc": wfc, "bfc": bfc, "rows": off}


# ---------------- one-time parameter re-layout (outside the per-call path) -----------
def prepare_params(params, kernel_sizes, input_size, num_filters, lstm_hidden,
                   output_size, seq_len):
    L, C, F, H = seq_len, input_size, num_filters, lstm_hidden
    n_feat = len(kernel_sizes) * F
    assert 4 * H == P, "full-width gate math assumes 4*lstm_hidden == 128"
    assert n_feat <= P and output_size <= P and H <= P

    # ---- slab 1: banded (Toeplitz) conv weight, both branches side by side ----------
    #   conv_slab[l*C + c, col + t*F + f] = w[f, c, l - t]   (zero outside the band)
    n_cols = sum((L - k + 1) * F for k in kernel_sizes)
    conv_slab = np.zeros((L * C, _round_up(n_cols, 128)), np.float32)
    col = 0
    for (w, _b), k in zip(params["convs"], kernel_sizes):
        w = np.asarray(w)                       # (F, C, k)
        l_out = L - k + 1
        for t in range(l_out):
            for dk in range(k):
                conv_slab[(t + dk) * C:(t + dk + 1) * C,
                          col + t * F:col + (t + 1) * F] = w[:, :, dk].T
        col += l_out * F

    # ---- slab 2: 128-lane slab with conv biases, padded LSTM weights, fc ------------
    layout = make_layout(len(params["lstm"]))
    slab = np.zeros((layout["rows"], P), np.float32)
    slab[layout["convb"], :n_feat] = np.concatenate(
        [np.asarray(b) for (_w, b) in params["convs"]])
    d_in = n_feat
    for (wih, whh, bih, bhh), (o_wih, o_whh, o_b) in zip(params["lstm"], layout["lstm"]):
        slab[o_wih:o_wih + d_in, :4 * H] = np.asarray(wih).T     # zero rows beyond d_in
        slab[o_whh:o_whh + H, :4 * H] = np.asarray(whh).T        # zero rows beyond H
        slab[o_b, :4 * H] = np.asarray(bih) + np.asarray(bhh)
        d_in = H
    w_fc, b_fc = params["fc"]
    slab[layout["wfc"]:layout["wfc"] + H, :output_size] = np.asarray(w_fc).T
    slab[layout["bfc"], :output_size] = np.asarray(b_fc)
    slab[layout["bfc"], output_size:] = -1e9      # softmax pad lanes -> exp underflows to 0

    return jnp.asarray(conv_slab), jnp.asarray(slab)


# ---------------- single fused kernel: conv+pool -> LSTM stack -> fc+softmax ----------
def make_fused_kernel(kernel_sizes, num_filters, lstm_hidden, num_lstm_layers, B, L, C):
    F, H = num_filters, lstm_hidden
    n_feat = len(kernel_sizes) * F
    layout = make_layout(num_lstm_layers)

    def kernel(x_ref, convw_ref, slab_ref, out_ref):
        # ---- CNN stage: one MXU matmul computes every tap of every branch -----------
        x = x_ref[...]                                               # (B, L*C) lane-dense
        cm = jax.lax.dot_general(
            x, convw_ref[...],
            dimension_numbers=(((1,), (0,)), ((), ())),
            preferred_element_type=jnp.float32)                      # (B, n_cols_pad)

        # global max-pool per branch; bias & ReLU commute with max -> applied once after
        feats = []
        col = 0
        for k in kernel_sizes:
            l_out = L - k + 1
            m = cm[:, col:col + F]
            for t in range(1, l_out):
                m = jnp.maximum(m, cm[:, col + t * F:col + (t + 1) * F])
            feats.append(m)
            col += l_out * F
        if n_feat < P:
            feats.append(jnp.zeros((B, P - n_feat), jnp.float32))
        seq = jnp.concatenate(feats, axis=1)                         # (B, P)
        convb = slab_ref[layout["convb"]:layout["convb"] + 1, :]     # (1, P)
        seq = jnp.maximum(seq + convb, 0.0)                          # bias+ReLU; pad lanes stay 0

        # ---- LSTM stack: recurrence over "time" = batch rows (PyTorch 2-D input) ----
        # Full 128-lane math throughout: no lane slicing; junk lanes are finite and get
        # annihilated by the zero rows of the padded weights.
        T = B
        for (o_wih, o_whh, o_b) in layout["lstm"]:
            wih = slab_ref[o_wih:o_wih + P, :]            # (P,P), zero rows beyond input dim
            whh = slab_ref[o_whh:o_whh + P, :]            # (P,P), zero rows beyond H
            bias = slab_ref[o_b:o_b + 1, :]               # (1,P)
            # hoisted input projection: one MXU matmul for all T steps
            gates_x = jnp.dot(seq, wih, preferred_element_type=jnp.float32) + bias  # (T,P)
            h = jnp.zeros((1, P), jnp.float32)
            c = jnp.zeros((1, P), jnp.float32)
            hs = []
            for t in range(T):                            # fully unrolled; T tiny & static
                gates = gates_x[t:t + 1, :] + jnp.dot(
                    h, whh, preferred_element_type=jnp.float32)      # (1,P)
                # 2 EUP pushes for all four gates: sigmoid(z) = 0.5*(tanh(z/2)+1)
                tanh_half = jnp.tanh(0.5 * gates)
                tanh_full = jnp.tanh(gates)
                sig = 0.5 * (tanh_half + 1.0)
                # PyTorch gate order (i,f,g,o) in H-lane blocks; align f/g/o onto block 0
                # with XLU lane rotations instead of masked lane slices.
                f_al = pltpu.roll(sig, shift=3 * H, axis=1)
                g_al = pltpu.roll(tanh_full, shift=2 * H, axis=1)
                o_al = pltpu.roll(sig, shift=H, axis=1)
                c = f_al * c + sig * g_al                 # i-gate == sig at block 0
                h = o_al * jnp.tanh(c)                    # lanes >= H: finite junk only
                hs.append(h)
            seq = jnp.concatenate(hs, axis=0)             # (T, P)

        # ---- fc + softmax; single lane-dense (B,128) output store --------------------
        wfc = slab_ref[layout["wfc"]:layout["wfc"] + P, :]
        bfc = slab_ref[layout["bfc"]:layout["bfc"] + 1, :]   # pad lanes = -1e9 -> exp == 0
        logits = jnp.dot(seq, wfc, preferred_element_type=jnp.float32) + bfc
        z = logits - jnp.max(logits, axis=1, keepdims=True)
        e = jnp.exp(z)
        out_ref[...] = e * pl.reciprocal(jnp.sum(e, axis=1, keepdims=True), approx=False)

    return kernel


def build_cnn_lstm_forward(kernel_sizes, num_filters, lstm_hidden, num_lstm_layers,
                           output_size, batch, seq_len, input_size):
    B, L, C = batch, seq_len, input_size
    kernel = make_fused_kernel(kernel_sizes, num_filters, lstm_hidden,
                               num_lstm_layers, B, L, C)
    n_cols_pad = _round_up(sum((L - k + 1) * num_filters for k in kernel_sizes), 128)
    slab_rows = make_layout(num_lstm_layers)["rows"]

    @jax.jit
    def forward(x, conv_slab, lstm_slab):
        x_flat = x.reshape(B, L * C)                       # lane-dense view of x
        out_pad = pl.pallas_call(
            kernel,
            out_shape=jax.ShapeDtypeStruct((B, P), jnp.float32),
            in_specs=[_full_spec((B, L * C)),
                      _full_spec((L * C, n_cols_pad)),
                      _full_spec((slab_rows, P))],
            out_specs=_full_spec((B, P)),
        )(x_flat, conv_slab, lstm_slab)
        return out_pad[:, :output_size]                    # drop softmax pad lanes

    return forward


# ---------------- pure-JAX reference for validation -----------------------------------
def reference_forward(x, params, kernel_sizes):
    B, L, _ = x.shape
    feats = []
    for (w, b), k in zip(params["convs"], kernel_sizes):
        l_out = L - k + 1
        acc = jnp.zeros((B, l_out, w.shape[0]), jnp.float32)
        for dk in range(k):
            acc = acc + jnp.einsum("blc,fc->blf", x[:, dk:dk + l_out, :], w[:, :, dk])
        acc = jnp.maximum(acc + b[None, None, :], 0.0)
        feats.append(jnp.max(acc, axis=1))
    seq = jnp.concatenate(feats, axis=1)
    for (wih, whh, bih, bhh) in params["lstm"]:
        H = whh.shape[1]
        h = jnp.zeros((H,), jnp.float32)
        c = jnp.zeros((H,), jnp.float32)
        outs = []
        for t in range(seq.shape[0]):
            gates = wih @ seq[t] + bih + whh @ h + bhh
            i = jax.nn.sigmoid(gates[0:H]); f = jax.nn.sigmoid(gates[H:2 * H])
            g = jnp.tanh(gates[2 * H:3 * H]); o = jax.nn.sigmoid(gates[3 * H:4 * H])
            c = f * c + i * g
            h = o * jnp.tanh(c)
            outs.append(h)
        seq = jnp.stack(outs, axis=0)
    w_fc, b_fc = params["fc"]
    logits = seq @ w_fc.T + b_fc
    z = logits - jnp.max(logits, axis=1, keepdims=True)
    e = jnp.exp(z)
    return e / jnp.sum(e, axis=1, keepdims=True)


if __name__ == "__main__":
    # module hyperparameters (small, consistent with __init__)
    input_size = 8
    num_filters = 16
    kernel_sizes = (3, 5)
    lstm_hidden = 32
    lstm_num_layers = 2
    output_size = 8
    B, L = 4, 16

    key = jax.random.PRNGKey(0)
    keys = iter(jax.random.split(key, 64))

    x = jax.random.normal(next(keys), (B, L, input_size), jnp.float32)

    # deterministic parameter init (PyTorch weight shapes)
    convs = []
    for k in kernel_sizes:
        w = 0.1 * jax.random.normal(next(keys), (num_filters, input_size, k), jnp.float32)
        b = 0.1 * jax.random.normal(next(keys), (num_filters,), jnp.float32)
        convs.append((w, b))

    lstm_input_size = len(kernel_sizes) * num_filters
    lstm = []
    d_in = lstm_input_size
    for _ in range(lstm_num_layers):
        wih = 0.1 * jax.random.normal(next(keys), (4 * lstm_hidden, d_in), jnp.float32)
        whh = 0.1 * jax.random.normal(next(keys), (4 * lstm_hidden, lstm_hidden), jnp.float32)
        bih = 0.1 * jax.random.normal(next(keys), (4 * lstm_hidden,), jnp.float32)
        bhh = 0.1 * jax.random.normal(next(keys), (4 * lstm_hidden,), jnp.float32)
        lstm.append((wih, whh, bih, bhh))
        d_in = lstm_hidden

    w_fc = 0.1 * jax.random.normal(next(keys), (output_size, lstm_hidden), jnp.float32)
    b_fc = 0.1 * jax.random.normal(next(keys), (output_size,), jnp.float32)

    params = {"convs": convs, "lstm": lstm, "fc": (w_fc, b_fc)}

    # one-time param packing into two lane-dense slabs (outside the per-call path)
    conv_slab, lstm_slab = prepare_params(params, kernel_sizes, input_size, num_filters,
                                          lstm_hidden, output_size, L)
    forward = build_cnn_lstm_forward(kernel_sizes, num_filters, lstm_hidden,
                                     lstm_num_layers, output_size, B, L, input_size)

    out = forward(x, conv_slab, lstm_slab)
    out = jax.block_until_ready(out)

    ref = reference_forward(x, params, kernel_sizes)
    assert out.shape == (B, output_size)
    assert jnp.allclose(out, ref, atol=1e-4, rtol=1e-4), "mismatch vs reference"
    assert jnp.allclose(jnp.sum(out, axis=1), 1.0, atol=1e-5)

    print("KERNEL_OK")
</pallas_src>

<mosaic_0001>
module attributes {stable_mosaic.version = 11 : i64} {
  func.func @kernel(%arg0: memref<4x128xf32, #tpu.memory_space<vmem>>, %arg1: memref<128x512xf32, #tpu.memory_space<vmem>>, %arg2: memref<672x128xf32, #tpu.memory_space<vmem>>, %arg3: memref<4x128xf32, #tpu.memory_space<vmem>>) attributes {dimension_semantics = [], scalar_prefetch = 0 : i64, scratch_operands = 0 : i64, tpu.core_type = #tpu.core_type<tc>} {
    %c0 = arith.constant 0 : index
    %c0_0 = arith.constant 0 : index
    %0 = vector.load %arg0[%c0, %c0_0] : memref<4x128xf32, #tpu.memory_space<vmem>>, vector<4x128xf32>
    %c0_1 = arith.constant 0 : index
    %c0_2 = arith.constant 0 : index
    %1 = vector.load %arg1[%c0_1, %c0_2] : memref<128x512xf32, #tpu.memory_space<vmem>>, vector<128x512xf32>
    %cst = arith.constant dense<0.000000e+00> : vector<4x512xf32>
    %2 = tpu.matmul %0, %1, %cst {dimension_numbers = #tpu.dot_dimension_numbers<[1], [0], [0], [1], [0, 0, 1, 1], [], []>} : vector<4x128xf32>, vector<128x512xf32>, vector<4x512xf32> -> vector<4x512xf32>
    %3 = vector.extract_strided_slice %2 {offsets = [0, 0], sizes = [4, 16], strides = [1, 1]} : vector<4x512xf32> to vector<4x16xf32>
    %4 = vector.extract_strided_slice %2 {offsets = [0, 16], sizes = [4, 16], strides = [1, 1]} : vector<4x512xf32> to vector<4x16xf32>
    %5 = arith.maximumf %3, %4 : vector<4x16xf32>
    %6 = vector.extract_strided_slice %2 {offsets = [0, 32], sizes = [4, 16], strides = [1, 1]} : vector<4x512xf32> to vector<4x16xf32>
    %7 = arith.maximumf %5, %6 : vector<4x16xf32>
    %8 = vector.extract_strided_slice %2 {offsets = [0, 48], sizes = [4, 16], strides = [1, 1]} : vector<4x512xf32> to vector<4x16xf32>
    %9 = arith.maximumf %7, %8 : vector<4x16xf32>
    %10 = vector.extract_strided_slice %2 {offsets = [0, 64], sizes = [4, 16], strides = [1, 1]} : vector<4x512xf32> to vector<4x16xf32>
    %11 = arith.maximumf %9, %10 : vector<4x16xf32>
    %12 = vector.extract_strided_slice %2 {offsets = [0, 80], sizes = [4, 16], strides = [1, 1]} : vector<4x512xf32> to vector<4x16xf32>
    %13 = arith.maximumf %11, %12 : vector<4x16xf32>
    %14 = vector.extract_strided_slice %2 {offsets = [0, 96], sizes = [4, 16], strides = [1, 1]} : vector<4x512xf32> to vector<4x16xf32>
    %15 = arith.maximumf %13, %14 : vector<4x16xf32>
    %16 = vector.extract_strided_slice %2 {offsets = [0, 112], sizes = [4, 16], strides = [1, 1]} : vector<4x512xf32> to vector<4x16xf32>
    %17 = arith.maximumf %15, %16 : vector<4x16xf32>
    %18 = vector.extract_strided_slice %2 {offsets = [0, 128], sizes = [4, 16], strides = [1, 1]} : vector<4x512xf32> to vector<4x16xf32>
    %19 = arith.maximumf %17, %18 : vector<4x16xf32>
    %20 = vector.extract_strided_slice %2 {offsets = [0, 144], sizes = [4, 16], strides = [1, 1]} : vector<4x512xf32> to vector<4x16xf32>
    %21 = arith.maximumf %19, %20 : vector<4x16xf32>
    %22 = vector.extract_strided_slice %2 {offsets = [0, 160], sizes = [4, 16], strides = [1, 1]} : vector<4x512xf32> to vector<4x16xf32>
    %23 = arith.maximumf %21, %22 : vector<4x16xf32>
    %24 = vector.extract_strided_slice %2 {offsets = [0, 176], sizes = [4, 16], strides = [1, 1]} : vector<4x512xf32> to vector<4x16xf32>
    %25 = arith.maximumf %23, %24 : vector<4x16xf32>
    %26 = vector.extract_strided_slice %2 {offsets = [0, 192], sizes = [4, 16], strides = [1, 1]} : vector<4x512xf32> to vector<4x16xf32>
    %27 = arith.maximumf %25, %26 : vector<4x16xf32>
    %28 = vector.extract_strided_slice %2 {offsets = [0, 208], sizes = [4, 16], strides = [1, 1]} : vector<4x512xf32> to vector<4x16xf32>
    %29 = arith.maximumf %27, %28 : vector<4x16xf32>
    %30 = vector.extract_strided_slice %2 {offsets = [0, 224], sizes = [4, 16], strides = [1, 1]} : vector<4x512xf32> to vector<4x16xf32>
    %31 = vector.extract_strided_slice %2 {offsets = [0, 240], sizes = [4, 16], strides = [1, 1]} : vector<4x512xf32> to vector<4x16xf32>
    %32 = arith.maximumf %30, %31 : vector<4x16xf32>
    %33 = vector.extract_strided_slice %2 {offsets = [0, 256], sizes = [4, 16], strides = [1, 1]} : vector<4x512xf32> to vector<4x16xf32>
    %34 = arith.maximumf %32, %33 : vector<4x16xf32>
    %35 = vector.extract_strided_slice %2 {offsets = [0, 272], sizes = [4, 16], strides = [1, 1]} : vector<4x512xf32> to vector<4x16xf32>
    %36 = arith.maximumf %34, %35 : vector<4x16xf32>
    %37 = vector.extract_strided_slice %2 {offsets = [0, 288], sizes = [4, 16], strides = [1, 1]} : vector<4x512xf32> to vector<4x16xf32>
    %38 = arith.maximumf %36, %37 : vector<4x16xf32>
    %39 = vector.extract_strided_slice %2 {offsets = [0, 304], sizes = [4, 16], strides = [1, 1]} : vector<4x512xf32> to vector<4x16xf32>
    %40 = arith.maximumf %38, %39 : vector<4x16xf32>
    %41 = vector.extract_strided_slice %2 {offsets = [0, 320], sizes = [4, 16], strides = [1, 1]} : vector<4x512xf32> to vector<4x16xf32>
    %42 = arith.maximumf %40, %41 : vector<4x16xf32>
    %43 = vector.extract_strided_slice %2 {offsets = [0, 336], sizes = [4, 16], strides = [1, 1]} : vector<4x512xf32> to vector<4x16xf32>
    %44 = arith.maximumf %42, %43 : vector<4x16xf32>
    %45 = vector.extract_strided_slice %2 {offsets = [0, 352], sizes = [4, 16], strides = [1, 1]} : vector<4x512xf32> to vector<4x16xf32>
    %46 = arith.maximumf %44, %45 : vector<4x16xf32>
    %47 = vector.extract_strided_slice %2 {offsets = [0, 368], sizes = [4, 16], strides = [1, 1]} : vector<4x512xf32> to vector<4x16xf32>
    %48 = arith.maximumf %46, %47 : vector<4x16xf32>
    %49 = vector.extract_strided_slice %2 {offsets = [0, 384], sizes = [4, 16], strides = [1, 1]} : vector<4x512xf32> to vector<4x16xf32>
    %50 = arith.maximumf %48, %49 : vector<4x16xf32>
    %51 = vector.extract_strided_slice %2 {offsets = [0, 400], sizes = [4, 16], strides = [1, 1]} : vector<4x512xf32> to vector<4x16xf32>
    %52 = arith.maximumf %50, %51 : vector<4x16xf32>
    %cst_3 = arith.constant 0.000000e+00 : f32
    %53 = vector.broadcast %cst_3 : f32 to vector<4x96xf32>
    %54 = tpu.concatenate %29, %52, %53 in 1 : vector<4x16xf32>, vector<4x16xf32>, vector<4x96xf32> -> vector<4x128xf32>
    %c0_4 = arith.constant 0 : index
    %c0_5 = arith.constant 0 : index
    %55 = vector.load %arg2[%c0_4, %c0_5] : memref<672x128xf32, #tpu.memory_space<vmem>>, vector<1x128xf32>
    %56 = vector.broadcast %55 : vector<1x128xf32> to vector<4x128xf32>
    %57 = arith.addf %54, %56 : vector<4x128xf32>
    %cst_6 = arith.constant 0.000000e+00 : f32
    %58 = vector.broadcast %cst_6 : f32 to vector<4x128xf32>
    %59 = arith.maximumf %57, %58 : vector<4x128xf32>
    %c8 = arith.constant 8 : index
    %c0_7 = arith.constant 0 : index
    %60 = vector.load %arg2[%c8, %c0_7] : memref<672x128xf32, #tpu.memory_space<vmem>>, vector<128x128xf32>
    %c136 = arith.constant 136 : index
    %c0_8 = arith.constant 0 : index
    %61 = vector.load %arg2[%c136, %c0_8] : memref<672x128xf32, #tpu.memory_space<vmem>>, vector<128x128xf32>
    %c264 = arith.constant 264 : index
    %c0_9 = arith.constant 0 : index
    %62 = vector.load %arg2[%c264, %c0_9] : memref<672x128xf32, #tpu.memory_space<vmem>>, vector<1x128xf32>
    %cst_10 = arith.constant dense<0.000000e+00> : vector<4x128xf32>
    %63 = tpu.matmul %59, %60, %cst_10 {dimension_numbers = #tpu.dot_dimension_numbers<[1], [0], [0], [1], [0, 0, 1, 1], [], []>} : vector<4x128xf32>, vector<128x128xf32>, vector<4x128xf32> -> vector<4x128xf32>
    %64 = vector.broadcast %62 : vector<1x128xf32> to vector<4x128xf32>
    %65 = arith.addf %63, %64 : vector<4x128xf32>
    %cst_11 = arith.constant 0.000000e+00 : f32
    %66 = vector.broadcast %cst_11 : f32 to vector<1x128xf32>
    %cst_12 = arith.constant 0.000000e+00 : f32
    %67 = vector.broadcast %cst_12 : f32 to vector<1x128xf32>
    %68 = vector.extract_strided_slice %65 {offsets = [0, 0], sizes = [1, 128], strides = [1, 1]} : vector<4x128xf32> to vector<1x128xf32>
    %cst_13 = arith.constant dense<0.000000e+00> : vector<1x128xf32>
    %69 = tpu.matmul %66, %61, %cst_13 {dimension_numbers = #tpu.dot_dimension_numbers<[1], [0], [0], [1], [0, 0, 1, 1], [], []>} : vector<1x128xf32>, vector<128x128xf32>, vector<1x128xf32> -> vector<1x128xf32>
    %70 = arith.addf %68, %69 : vector<1x128xf32>
    %cst_14 = arith.constant 5.000000e-01 : f32
    %71 = vector.broadcast %cst_14 : f32 to vector<1x128xf32>
    %72 = arith.mulf %71, %70 : vector<1x128xf32>
    %73 = math.tanh %72 : vector<1x128xf32>
    %74 = math.tanh %70 : vector<1x128xf32>
    %cst_15 = arith.constant 1.000000e+00 : f32
    %75 = vector.broadcast %cst_15 : f32 to vector<1x128xf32>
    %76 = arith.addf %73, %75 : vector<1x128xf32>
    %cst_16 = arith.constant 5.000000e-01 : f32
    %77 = vector.broadcast %cst_16 : f32 to vector<1x128xf32>
    %78 = arith.mulf %77, %76 : vector<1x128xf32>
    %c96_i32 = arith.constant 96 : i32
    %79 = tpu.dynamic_rotate %78 by %c96_i32 dim 1 : vector<1x128xf32>, i32 -> vector<1x128xf32>
    %c64_i32 = arith.constant 64 : i32
    %80 = tpu.dynamic_rotate %74 by %c64_i32 dim 1 : vector<1x128xf32>, i32 -> vector<1x128xf32>
    %c32_i32 = arith.constant 32 : i32
    %81 = tpu.dynamic_rotate %78 by %c32_i32 dim 1 : vector<1x128xf32>, i32 -> vector<1x128xf32>
    %82 = arith.mulf %79, %67 : vector<1x128xf32>
    %83 = arith.mulf %78, %80 : vector<1x128xf32>
    %84 = arith.addf %82, %83 : vector<1x128xf32>
    %85 = math.tanh %84 : vector<1x128xf32>
    %86 = arith.mulf %81, %85 : vector<1x128xf32>
    %87 = vector.extract_strided_slice %65 {offsets = [1, 0], sizes = [1, 128], strides = [1, 1]} : vector<4x128xf32> to vector<1x128xf32>
    %cst_17 = arith.constant dense<0.000000e+00> : vector<1x128xf32>
    %88 = tpu.matmul %86, %61, %cst_17 {dimension_numbers = #tpu.dot_dimension_numbers<[1], [0], [0], [1], [0, 0, 1, 1], [], []>} : vector<1x128xf32>, vector<128x128xf32>, vector<1x128xf32> -> vector<1x128xf32>
    %89 = arith.addf %87, %88 : vector<1x128xf32>
    %cst_18 = arith.constant 5.000000e-01 : f32
    %90 = vector.broadcast %cst_18 : f32 to vector<1x128xf32>
    %91 = arith.mulf %90, %89 : vector<1x128xf32>
    %92 = math.tanh %91 : vector<1x128xf32>
    %93 = math.tanh %89 : vector<1x128xf32>
    %cst_19 = arith.constant 1.000000e+00 : f32
    %94 = vector.broadcast %cst_19 : f32 to vector<1x128xf32>
    %95 = arith.addf %92, %94 : vector<1x128xf32>
    %cst_20 = arith.constant 5.000000e-01 : f32
    %96 = vector.broadcast %cst_20 : f32 to vector<1x128xf32>
    %97 = arith.mulf %96, %95 : vector<1x128xf32>
    %c96_i32_21 = arith.constant 96 : i32
    %98 = tpu.dynamic_rotate %97 by %c96_i32_21 dim 1 : vector<1x128xf32>, i32 -> vector<1x128xf32>
    %c64_i32_22 = arith.constant 64 : i32
    %99 = tpu.dynamic_rotate %93 by %c64_i32_22 dim 1 : vector<1x128xf32>, i32 -> vector<1x128xf32>
    %c32_i32_23 = arith.constant 32 : i32
    %100 = tpu.dynamic_rotate %97 by %c32_i32_23 dim 1 : vector<1x128xf32>, i32 -> vector<1x128xf32>
    %101 = arith.mulf %98, %84 : vector<1x128xf32>
    %102 = arith.mulf %97, %99 : vector<1x128xf32>
    %103 = arith.addf %101, %102 : vector<1x128xf32>
    %104 = math.tanh %103 : vector<1x128xf32>
    %105 = arith.mulf %100, %104 : vector<1x128xf32>
    %106 = vector.extract_strided_slice %65 {offsets = [2, 0], sizes = [1, 128], strides = [1, 1]} : vector<4x128xf32> to vector<1x128xf32>
    %cst_24 = arith.constant dense<0.000000e+00> : vector<1x128xf32>
    %107 = tpu.matmul %105, %61, %cst_24 {dimension_numbers = #tpu.dot_dimension_numbers<[1], [0], [0], [1], [0, 0, 1, 1], [], []>} : vector<1x128xf32>, vector<128x128xf32>, vector<1x128xf32> -> vector<1x128xf32>
    %108 = arith.addf %106, %107 : vector<1x128xf32>
    %cst_25 = arith.constant 5.000000e-01 : f32
    %109 = vector.broadcast %cst_25 : f32 to vector<1x128xf32>
    %110 = arith.mulf %109, %108 : vector<1x128xf32>
    %111 = math.tanh %110 : vector<1x128xf32>
    %112 = math.tanh %108 : vector<1x128xf32>
    %cst_26 = arith.constant 1.000000e+00 : f32
    %113 = vector.broadcast %cst_26 : f32 to vector<1x128xf32>
    %114 = arith.addf %111, %113 : vector<1x128xf32>
    %cst_27 = arith.constant 5.000000e-01 : f32
    %115 = vector.broadcast %cst_27 : f32 to vector<1x128xf32>
    %116 = arith.mulf %115, %114 : vector<1x128xf32>
    %c96_i32_28 = arith.constant 96 : i32
    %117 = tpu.dynamic_rotate %116 by %c96_i32_28 dim 1 : vector<1x128xf32>, i32 -> vector<1x128xf32>
    %c64_i32_29 = arith.constant 64 : i32
    %118 = tpu.dynamic_rotate %112 by %c64_i32_29 dim 1 : vector<1x128xf32>, i32 -> vector<1x128xf32>
    %c32_i32_30 = arith.constant 32 : i32
    %119 = tpu.dynamic_rotate %116 by %c32_i32_30 dim 1 : vector<1x128xf32>, i32 -> vector<1x128xf32>
    %120 = arith.mulf %117, %103 : vector<1x128xf32>
    %121 = arith.mulf %116, %118 : vector<1x128xf32>
    %122 = arith.addf %120, %121 : vector<1x128xf32>
    %123 = math.tanh %122 : vector<1x128xf32>
    %124 = arith.mulf %119, %123 : vector<1x128xf32>
    %125 = vector.extract_strided_slice %65 {offsets = [3, 0], sizes = [1, 128], strides = [1, 1]} : vector<4x128xf32> to vector<1x128xf32>
    %cst_31 = arith.constant dense<0.000000e+00> : vector<1x128xf32>
    %126 = tpu.matmul %124, %61, %cst_31 {dimension_numbers = #tpu.dot_dimension_numbers<[1], [0], [0], [1], [0, 0, 1, 1], [], []>} : vector<1x128xf32>, vector<128x128xf32>, vector<1x128xf32> -> vector<1x128xf32>
    %127 = arith.addf %125, %126 : vector<1x128xf32>
    %cst_32 = arith.constant 5.000000e-01 : f32
    %128 = vector.broadcast %cst_32 : f32 to vector<1x128xf32>
    %129 = arith.mulf %128, %127 : vector<1x128xf32>
    %130 = math.tanh %129 : vector<1x128xf32>
    %131 = math.tanh %127 : vector<1x128xf32>
    %cst_33 = arith.constant 1.000000e+00 : f32
    %132 = vector.broadcast %cst_33 : f32 to vector<1x128xf32>
    %133 = arith.addf %130, %132 : vector<1x128xf32>
    %cst_34 = arith.constant 5.000000e-01 : f32
    %134 = vector.broadcast %cst_34 : f32 to vector<1x128xf32>
    %135 = arith.mulf %134, %133 : vector<1x128xf32>
    %c96_i32_35 = arith.constant 96 : i32
    %136 = tpu.dynamic_rotate %135 by %c96_i32_35 dim 1 : vector<1x128xf32>, i32 -> vector<1x128xf32>
    %c64_i32_36 = arith.constant 64 : i32
    %137 = tpu.dynamic_rotate %131 by %c64_i32_36 dim 1 : vector<1x128xf32>, i32 -> vector<1x128xf32>
    %c32_i32_37 = arith.constant 32 : i32
    %138 = tpu.dynamic_rotate %135 by %c32_i32_37 dim 1 : vector<1x128xf32>, i32 -> vector<1x128xf32>
    %139 = arith.mulf %136, %122 : vector<1x128xf32>
    %140 = arith.mulf %135, %137 : vector<1x128xf32>
    %141 = arith.addf %139, %140 : vector<1x128xf32>
    %142 = math.tanh %141 : vector<1x128xf32>
    %143 = arith.mulf %138, %142 : vector<1x128xf32>
    %144 = tpu.concatenate %86, %105, %124, %143 in 0 : vector<1x128xf32>, vector<1x128xf32>, vector<1x128xf32>, vector<1x128xf32> -> vector<4x128xf32>
    %c272 = arith.constant 272 : index
    %c0_38 = arith.constant 0 : index
    %145 = vector.load %arg2[%c272, %c0_38] : memref<672x128xf32, #tpu.memory_space<vmem>>, vector<128x128xf32>
    %c400 = arith.constant 400 : index
    %c0_39 = arith.constant 0 : index
    %146 = vector.load %arg2[%c400, %c0_39] : memref<672x128xf32, #tpu.memory_space<vmem>>, vector<128x128xf32>
    %c528 = arith.constant 528 : index
    %c0_40 = arith.constant 0 : index
    %147 = vector.load %arg2[%c528, %c0_40] : memref<672x128xf32, #tpu.memory_space<vmem>>, vector<1x128xf32>
    %cst_41 = arith.constant dense<0.000000e+00> : vector<4x128xf32>
    %148 = tpu.matmul %144, %145, %cst_41 {dimension_numbers = #tpu.dot_dimension_numbers<[1], [0], [0], [1], [0, 0, 1, 1], [], []>} : vector<4x128xf32>, vector<128x128xf32>, vector<4x128xf32> -> vector<4x128xf32>
    %149 = vector.broadcast %147 : vector<1x128xf32> to vector<4x128xf32>
    %150 = arith.addf %148, %149 : vector<4x128xf32>
    %cst_42 = arith.constant 0.000000e+00 : f32
    %151 = vector.broadcast %cst_42 : f32 to vector<1x128xf32>
    %cst_43 = arith.constant 0.000000e+00 : f32
    %152 = vector.broadcast %cst_43 : f32 to vector<1x128xf32>
    %153 = vector.extract_strided_slice %150 {offsets = [0, 0], sizes = [1, 128], strides = [1, 1]} : vector<4x128xf32> to vector<1x128xf32>
    %cst_44 = arith.constant dense<0.000000e+00> : vector<1x128xf32>
    %154 = tpu.matmul %151, %146, %cst_44 {dimension_numbers = #tpu.dot_dimension_numbers<[1], [0], [0], [1], [0, 0, 1, 1], [], []>} : vector<1x128xf32>, vector<128x128xf32>, vector<1x128xf32> -> vector<1x128xf32>
    %155 = arith.addf %153, %154 : vector<1x128xf32>
    %cst_45 = arith.constant 5.000000e-01 : f32
    %156 = vector.broadcast %cst_45 : f32 to vector<1x128xf32>
    %157 = arith.mulf %156, %155 : vector<1x128xf32>
    %158 = math.tanh %157 : vector<1x128xf32>
    %159 = math.tanh %155 : vector<1x128xf32>
    %cst_46 = arith.constant 1.000000e+00 : f32
    %160 = vector.broadcast %cst_46 : f32 to vector<1x128xf32>
    %161 = arith.addf %158, %160 : vector<1x128xf32>
    %cst_47 = arith.constant 5.000000e-01 : f32
    %162 = vector.broadcast %cst_47 : f32 to vector<1x128xf32>
    %163 = arith.mulf %162, %161 : vector<1x128xf32>
    %c96_i32_48 = arith.constant 96 : i32
    %164 = tpu.dynamic_rotate %163 by %c96_i32_48 dim 1 : vector<1x128xf32>, i32 -> vector<1x128xf32>
    %c64_i32_49 = arith.constant 64 : i32
    %165 = tpu.dynamic_rotate %159 by %c64_i32_49 dim 1 : vector<1x128xf32>, i32 -> vector<1x128xf32>
    %c32_i32_50 = arith.constant 32 : i32
    %166 = tpu.dynamic_rotate %163 by %c32_i32_50 dim 1 : vector<1x128xf32>, i32 -> vector<1x128xf32>
    %167 = arith.mulf %164, %152 : vector<1x128xf32>
    %168 = arith.mulf %163, %165 : vector<1x128xf32>
    %169 = arith.addf %167, %168 : vector<1x128xf32>
    %170 = math.tanh %169 : vector<1x128xf32>
    %171 = arith.mulf %166, %170 : vector<1x128xf32>
    %172 = vector.extract_strided_slice %150 {offsets = [1, 0], sizes = [1, 128], strides = [1, 1]} : vector<4x128xf32> to vector<1x128xf32>
    %cst_51 = arith.constant dense<0.000000e+00> : vector<1x128xf32>
    %173 = tpu.matmul %171, %146, %cst_51 {dimension_numbers = #tpu.dot_dimension_numbers<[1], [0], [0], [1], [0, 0, 1, 1], [], []>} : vector<1x128xf32>, vector<128x128xf32>, vector<1x128xf32> -> vector<1x128xf32>
    %174 = arith.addf %172, %173 : vector<1x128xf32>
    %cst_52 = arith.constant 5.000000e-01 : f32
    %175 = vector.broadcast %cst_52 : f32 to vector<1x128xf32>
    %176 = arith.mulf %175, %174 : vector<1x128xf32>
    %177 = math.tanh %176 : vector<1x128xf32>
    %178 = math.tanh %174 : vector<1x128xf32>
    %cst_53 = arith.constant 1.000000e+00 : f32
    %179 = vector.broadcast %cst_53 : f32 to vector<1x128xf32>
    %180 = arith.addf %177, %179 : vector<1x128xf32>
    %cst_54 = arith.constant 5.000000e-01 : f32
    %181 = vector.broadcast %cst_54 : f32 to vector<1x128xf32>
    %182 = arith.mulf %181, %180 : vector<1x128xf32>
    %c96_i32_55 = arith.constant 96 : i32
    %183 = tpu.dynamic_rotate %182 by %c96_i32_55 dim 1 : vector<1x128xf32>, i32 -> vector<1x128xf32>
    %c64_i32_56 = arith.constant 64 : i32
    %184 = tpu.dynamic_rotate %178 by %c64_i32_56 dim 1 : vector<1x128xf32>, i32 -> vector<1x128xf32>
    %c32_i32_57 = arith.constant 32 : i32
    %185 = tpu.dynamic_rotate %182 by %c32_i32_57 dim 1 : vector<1x128xf32>, i32 -> vector<1x128xf32>
    %186 = arith.mulf %183, %169 : vector<1x128xf32>
    %187 = arith.mulf %182, %184 : vector<1x128xf32>
    %188 = arith.addf %186, %187 : vector<1x128xf32>
    %189 = math.tanh %188 : vector<1x128xf32>
    %190 = arith.mulf %185, %189 : vector<1x128xf32>
    %191 = vector.extract_strided_slice %150 {offsets = [2, 0], sizes = [1, 128], strides = [1, 1]} : vector<4x128xf32> to vector<1x128xf32>
    %cst_58 = arith.constant dense<0.000000e+00> : vector<1x128xf32>
    %192 = tpu.matmul %190, %146, %cst_58 {dimension_numbers = #tpu.dot_dimension_numbers<[1], [0], [0], [1], [0, 0, 1, 1], [], []>} : vector<1x128xf32>, vector<128x128xf32>, vector<1x128xf32> -> vector<1x128xf32>
    %193 = arith.addf %191, %192 : vector<1x128xf32>
    %cst_59 = arith.constant 5.000000e-01 : f32
    %194 = vector.broadcast %cst_59 : f32 to vector<1x128xf32>
    %195 = arith.mulf %194, %193 : vector<1x128xf32>
    %196 = math.tanh %195 : vector<1x128xf32>
    %197 = math.tanh %193 : vector<1x128xf32>
    %cst_60 = arith.constant 1.000000e+00 : f32
    %198 = vector.broadcast %cst_60 : f32 to vector<1x128xf32>
    %199 = arith.addf %196, %198 : vector<1x128xf32>
    %cst_61 = arith.constant 5.000000e-01 : f32
    %200 = vector.broadcast %cst_61 : f32 to vector<1x128xf32>
    %201 = arith.mulf %200, %199 : vector<1x128xf32>
    %c96_i32_62 = arith.constant 96 : i32
    %202 = tpu.dynamic_rotate %201 by %c96_i32_62 dim 1 : vector<1x128xf32>, i32 -> vector<1x128xf32>
    %c64_i32_63 = arith.constant 64 : i32
    %203 = tpu.dynamic_rotate %197 by %c64_i32_63 dim 1 : vector<1x128xf32>, i32 -> vector<1x128xf32>
    %c32_i32_64 = arith.constant 32 : i32
    %204 = tpu.dynamic_rotate %201 by %c32_i32_64 dim 1 : vector<1x128xf32>, i32 -> vector<1x128xf32>
    %205 = arith.mulf %202, %188 : vector<1x128xf32>
    %206 = arith.mulf %201, %203 : vector<1x128xf32>
    %207 = arith.addf %205, %206 : vector<1x128xf32>
    %208 = math.tanh %207 : vector<1x128xf32>
    %209 = arith.mulf %204, %208 : vector<1x128xf32>
    %210 = vector.extract_strided_slice %150 {offsets = [3, 0], sizes = [1, 128], strides = [1, 1]} : vector<4x128xf32> to vector<1x128xf32>
    %cst_65 = arith.constant dense<0.000000e+00> : vector<1x128xf32>
    %211 = tpu.matmul %209, %146, %cst_65 {dimension_numbers = #tpu.dot_dimension_numbers<[1], [0], [0], [1], [0, 0, 1, 1], [], []>} : vector<1x128xf32>, vector<128x128xf32>, vector<1x128xf32> -> vector<1x128xf32>
    %212 = arith.addf %210, %211 : vector<1x128xf32>
    %cst_66 = arith.constant 5.000000e-01 : f32
    %213 = vector.broadcast %cst_66 : f32 to vector<1x128xf32>
    %214 = arith.mulf %213, %212 : vector<1x128xf32>
    %215 = math.tanh %214 : vector<1x128xf32>
    %216 = math.tanh %212 : vector<1x128xf32>
    %cst_67 = arith.constant 1.000000e+00 : f32
    %217 = vector.broadcast %cst_67 : f32 to vector<1x128xf32>
    %218 = arith.addf %215, %217 : vector<1x128xf32>
    %cst_68 = arith.constant 5.000000e-01 : f32
    %219 = vector.broadcast %cst_68 : f32 to vector<1x128xf32>
    %220 = arith.mulf %219, %218 : vector<1x128xf32>
    %c96_i32_69 = arith.constant 96 : i32
    %221 = tpu.dynamic_rotate %220 by %c96_i32_69 dim 1 : vector<1x128xf32>, i32 -> vector<1x128xf32>
    %c64_i32_70 = arith.constant 64 : i32
    %222 = tpu.dynamic_rotate %216 by %c64_i32_70 dim 1 : vector<1x128xf32>, i32 -> vector<1x128xf32>
    %c32_i32_71 = arith.constant 32 : i32
    %223 = tpu.dynamic_rotate %220 by %c32_i32_71 dim 1 : vector<1x128xf32>, i32 -> vector<1x128xf32>
    %224 = arith.mulf %221, %207 : vector<1x128xf32>
    %225 = arith.mulf %220, %222 : vector<1x128xf32>
    %226 = arith.addf %224, %225 : vector<1x128xf32>
    %227 = math.tanh %226 : vector<1x128xf32>
    %228 = arith.mulf %223, %227 : vector<1x128xf32>
    %229 = tpu.concatenate %171, %190, %209, %228 in 0 : vector<1x128xf32>, vector<1x128xf32>, vector<1x128xf32>, vector<1x128xf32> -> vector<4x128xf32>
    %c536 = arith.constant 536 : index
    %c0_72 = arith.constant 0 : index
    %230 = vector.load %arg2[%c536, %c0_72] : memref<672x128xf32, #tpu.memory_space<vmem>>, vector<128x128xf32>
    %c664 = arith.constant 664 : index
    %c0_73 = arith.constant 0 : index
    %231 = vector.load %arg2[%c664, %c0_73] : memref<672x128xf32, #tpu.memory_space<vmem>>, vector<1x128xf32>
    %cst_74 = arith.constant dense<0.000000e+00> : vector<4x128xf32>
    %232 = tpu.matmul %229, %230, %cst_74 {dimension_numbers = #tpu.dot_dimension_numbers<[1], [0], [0], [1], [0, 0, 1, 1], [], []>} : vector<4x128xf32>, vector<128x128xf32>, vector<4x128xf32> -> vector<4x128xf32>
    %233 = vector.broadcast %231 : vector<1x128xf32> to vector<4x128xf32>
    %234 = arith.addf %232, %233 : vector<4x128xf32>
    %cst_75 = arith.constant dense<0xFF800000> : vector<4xf32>
    %235 = vector.multi_reduction <maximumf>, %234, %cst_75 [1] : vector<4x128xf32> to vector<4xf32>
    %236 = vector.shape_cast %235 : vector<4xf32> to vector<4x1xf32>
    %237 = vector.broadcast %236 : vector<4x1xf32> to vector<4x128xf32>
    %238 = arith.subf %234, %237 : vector<4x128xf32>
    %239 = math.exp %238 : vector<4x128xf32>
    %cst_76 = arith.constant dense<0.000000e+00> : vector<4xf32>
    %240 = vector.multi_reduction <add>, %239, %cst_76 [1] : vector<4x128xf32> to vector<4xf32>
    %241 = vector.shape_cast %240 : vector<4xf32> to vector<4x1xf32>
    %242 = tpu.reciprocal %241 : vector<4x1xf32> -> vector<4x1xf32>
    %243 = vector.broadcast %242 : vector<4x1xf32> to vector<4x128xf32>
    %244 = arith.mulf %239, %243 : vector<4x128xf32>
    %c0_77 = arith.constant 0 : index
    %c0_78 = arith.constant 0 : index
    %245 = vector.load %arg3[%c0_77, %c0_78] : memref<4x128xf32, #tpu.memory_space<vmem>>, vector<4x128xf32>
    tpu.vector_store %arg3[%c0_77, %c0_78], %244 {strides = array<i32>} : memref<4x128xf32, #tpu.memory_space<vmem>>, vector<4x128xf32>,
    return
  }
}

</mosaic_0001>

<llo_original>
// kernel: forward.1
$region0: #{forward.1}
  #allocation0 [shape = 'u32[]', space=smem, size = 0x4, offset = 0x4, fixed_abs, tag = 'smem constant byte address 0x4 - core index']
  #allocation1 [shape = 'u32[144,128]{1,0:T(1,128)}', space=vmem, size = 0x12000, scoped, tag = 'internal scratch']
  %s0 = inlined_call_operand.vmem [shape: f32[4,128], index: 0, kind: input, shape index: {}]
  %s1 = inlined_call_operand.hbm [shape: f32[128,512], index: 1, kind: input, shape index: {}]
  %s2 = inlined_call_operand.hbm [shape: f32[672,128], index: 2, kind: input, shape index: {}]
  %s3 = inlined_call_operand.hbm [shape: f32[4,128], index: 3, kind: output, shape index: {}]
  %s4 = sld [smem:[#allocation0]]
  $region30: #{forward.1} parent=0
    _
  %s6 = ssub.s32 1, %s4
  %s7 = scalar_select 0, %s6, %s4
  $region1: #{forward.1} parent=0
    #allocation2 [shape = 'u8[262144]{0}', space=vmem, size = 0x40000, scoped, tag = 'input window, operand 1, single buffered']
    #allocation3 [shape = 's32[1]{0}', space=sflag, size = 0x4, scoped, tag = 'scoped memory for forward.1']
    #allocation4 [shape = 's32[1]{0}', space=sflag, size = 0x4, scoped, tag = 'scoped memory for forward.1']
    #allocation5 [shape = 'u8[344064]{0}', space=vmem, size = 0x54000, scoped, tag = 'input window, operand 2, single buffered']
    #allocation6 [shape = 's32[1]{0}', space=sflag, size = 0x4, scoped, tag = 'scoped memory for forward.1']
    #allocation7 [shape = 'u8[2048]{0}', space=vmem, size = 0x800, scoped, tag = 'output window, operand 0, single buffered']
    %8 = vsyncpa [#allocation3], 0
    %9 = vsyncpa [#allocation6], 0
    %10 = vsyncpa [#allocation4], 0
    // Predicated region
    $region2: #{forward.1} parent=1 // pred_check
      _
    $region3: #{forward.1} parent=1 // pred_check_branch
      %12 = sbr.rel (0) target = $region5
    $region4: #{forward.1} parent=1 // pred_region
      _
    $region5: #{forward.1} parent=1 // pred_fallthru
      _
    // Predicated region
    $region6: #{forward.1} parent=1 // pred_check
      _
    $region7: #{forward.1} parent=1 // pred_check_branch
      %14 = sbr.rel (0) target = $region9
    $region8: #{forward.1} parent=1 // pred_region
      %s16 = ssub.s32 8192, 8192
      %17 = vsyncadd [#allocation3], %s16
      %s18 = sshll.u32 [#allocation2], 4
      %s19 = int_to_ptr.vmem [resolvable:$true] %s18
      %24 = dma.hbm_to_vmem [thread:$0]  %s1, 8192, %s19, [#allocation3], 512, 512, 32
    $region9: #{forward.1} parent=1 // pred_fallthru
      _
    // Predicated region
    $region10: #{forward.1} parent=1 // pred_check
      _
    $region11: #{forward.1} parent=1 // pred_check_branch
      %26 = sbr.rel (0) target = $region13
    $region12: #{forward.1} parent=1 // pred_region
      %s28 = ssub.s32 10752, 10752
      %29 = vsyncadd [#allocation6], %s28
      %s30 = sshll.u32 [#allocation5], 4
      %s31 = int_to_ptr.vmem [resolvable:$true] %s30
      %36 = dma.hbm_to_vmem [thread:$0]  %s2, 10752, %s31, [#allocation6], 128, 128, 8
    $region13: #{forward.1} parent=1 // pred_fallthru
      _
    // Predicated region
    $region14: #{forward.1} parent=1 // pred_check
      _
    $region15: #{forward.1} parent=1 // pred_check_branch
      %38 = sbr.rel (0) target = $region17
    $region16: #{forward.1} parent=1 // pred_region
      %39 = dma.done [#allocation3], 8192
    $region17: #{forward.1} parent=1 // pred_fallthru
      _
    // Predicated region
    $region18: #{forward.1} parent=1 // pred_check
      _
    $region19: #{forward.1} parent=1 // pred_check_branch
      %41 = sbr.rel (0) target = $region21
    $region20: #{forward.1} parent=1 // pred_region
      %42 = dma.done [#allocation6], 10752
    $region21: #{forward.1} parent=1 // pred_fallthru
      _
    %v43 = vld [vmem:[%s0] sm:$0xf]
    %v44 = vld [vmem:[#allocation2] sm:$0xff]
    %v45 = vld [vmem:[#allocation2 + $0x8] sm:$0xff]
    %v46 = vld [vmem:[#allocation2 + $0x10] sm:$0xff]
    %v47 = vld [vmem:[#allocation2 + $0x18] sm:$0xff]
    %v48 = vld [vmem:[#allocation2 + $0x20] sm:$0xff]
    %v49 = vld [vmem:[#allocation2 + $0x28] sm:$0xff]
    %v50 = vld [vmem:[#allocation2 + $0x30] sm:$0xff]
    %v51 = vld [vmem:[#allocation2 + $0x38] sm:$0xff]
    %v52 = vld [vmem:[#allocation2 + $0x40] sm:$0xff]
    %v53 = vld [vmem:[#allocation2 + $0x48] sm:$0xff]
    %v54 = vld [vmem:[#allocation2 + $0x50] sm:$0xff]
    %v55 = vld [vmem:[#allocation2 + $0x58] sm:$0xff]
    %v56 = vld [vmem:[#allocation2 + $0x60] sm:$0xff]
    %v57 = vld [vmem:[#allocation2 + $0x68] sm:$0xff]
    %v58 = vld [vmem:[#allocation2 + $0x70] sm:$0xff]
    %v59 = vld [vmem:[#allocation2 + $0x78] sm:$0xff]
    %v60 = vld [vmem:[#allocation2 + $0x80] sm:$0xff]
    %v61 = vld [vmem:[#allocation2 + $0x88] sm:$0xff]
    %v62 = vld [vmem:[#allocation2 + $0x90] sm:$0xff]
    %v63 = vld [vmem:[#allocation2 + $0x98] sm:$0xff]
    %v64 = vld [vmem:[#allocation2 + $0xa0] sm:$0xff]
    %v65 = vld [vmem:[#allocation2 + $0xa8] sm:$0xff]
    %v66 = vld [vmem:[#allocation2 + $0xb0] sm:$0xff]
    %v67 = vld [vmem:[#allocation2 + $0xb8] sm:$0xff]
    %v68 = vld [vmem:[#allocation2 + $0xc0] sm:$0xff]
    %v69 = vld [vmem:[#allocation2 + $0xc8] sm:$0xff]
    %v70 = vld [vmem:[#allocation2 + $0xd0] sm:$0xff]
    %v71 = vld [vmem:[#allocation2 + $0xd8] sm:$0xff]
    %v72 = vld [vmem:[#allocation2 + $0xe0] sm:$0xff]
    %v73 = vld [vmem:[#allocation2 + $0xe8] sm:$0xff]
    %v74 = vld [vmem:[#allocation2 + $0xf0] sm:$0xff]
    %v75 = vld [vmem:[#allocation2 + $0xf8] sm:$0xff]
    %v76 = vld [vmem:[#allocation2 + $0x100] sm:$0xff]
    %v77 = vld [vmem:[#allocation2 + $0x108] sm:$0xff]
    %v78 = vld [vmem:[#allocation2 + $0x110] sm:$0xff]
    %v79 = vld [vmem:[#allocation2 + $0x118] sm:$0xff]
    %v80 = vld [vmem:[#allocation2 + $0x120] sm:$0xff]
    %v81 = vld [vmem:[#allocation2 + $0x128] sm:$0xff]
    %v82 = vld [vmem:[#allocation2 + $0x130] sm:$0xff]
    %v83 = vld [vmem:[#allocation2 + $0x138] sm:$0xff]
    %v84 = vld [vmem:[#allocation2 + $0x140] sm:$0xff]
    %v85 = vld [vmem:[#allocation2 + $0x148] sm:$0xff]
    %v86 = vld [vmem:[#allocation2 + $0x150] sm:$0xff]
    %v87 = vld [vmem:[#allocation2 + $0x158] sm:$0xff]
    %v88 = vld [vmem:[#allocation2 + $0x160] sm:$0xff]
    %v89 = vld [vmem:[#allocation2 + $0x168] sm:$0xff]
    %v90 = vld [vmem:[#allocation2 + $0x170] sm:$0xff]
    %v91 = vld [vmem:[#allocation2 + $0x178] sm:$0xff]
    %v92 = vld [vmem:[#allocation2 + $0x180] sm:$0xff]
    %v93 = vld [vmem:[#allocation2 + $0x188] sm:$0xff]
    %v94 = vld [vmem:[#allocation2 + $0x190] sm:$0xff]
    %v95 = vld [vmem:[#allocation2 + $0x198] sm:$0xff]
    %v96 = vld [vmem:[#allocation2 + $0x1a0] sm:$0xff]
    %v97 = vld [vmem:[#allocation2 + $0x1a8] sm:$0xff]
    %v98 = vld [vmem:[#allocation2 + $0x1b0] sm:$0xff]
    %v99 = vld [vmem:[#allocation2 + $0x1b8] sm:$0xff]
    %v100 = vld [vmem:[#allocation2 + $0x1c0] sm:$0xff]
    %v101 = vld [vmem:[#allocation2 + $0x1c8] sm:$0xff]
    %v102 = vld [vmem:[#allocation2 + $0x1d0] sm:$0xff]
    %v103 = vld [vmem:[#allocation2 + $0x1d8] sm:$0xff]
    %v104 = vld [vmem:[#allocation2 + $0x1e0] sm:$0xff]
    %v105 = vld [vmem:[#allocation2 + $0x1e8] sm:$0xff]
    %v106 = vld [vmem:[#allocation2 + $0x1f0] sm:$0xff]
    %v107 = vld [vmem:[#allocation2 + $0x1f8] sm:$0xff]
    %108 = vmatprep.subr.mxu0 %v45
    %109 = vmatpush1.msra.mxu0 %v44
    %110 = vmatprep.subr.mxu0 %v49
    %111 = vmatpush1.msra.mxu0 %v48
    %112 = vmatprep.subr.mxu0 %v53
    %113 = vmatpush1.msra.mxu0 %v52
    %114 = vmatprep.subr.mxu0 %v57
    %115 = vmatpush1.msra.mxu0 %v56
    %116 = vmatprep.subr.mxu0 %v61
    %117 = vmatpush1.msra.mxu0 %v60
    %118 = vmatprep.subr.mxu0 %v65
    %119 = vmatpush1.msra.mxu0 %v64
    %120 = vmatprep.subr.mxu0 %v69
    %121 = vmatpush1.msra.mxu0 %v68
    %122 = vmatprep.subr.mxu0 %v73
    %123 = vmatpush1.msra.mxu0 %v72
    %124 = vmatprep.subr.mxu0 %v77
    %125 = vmatpush1.msra.mxu0 %v76
    %126 = vmatprep.subr.mxu0 %v81
    %127 = vmatpush1.msra.mxu0 %v80
    %128 = vmatprep.subr.mxu0 %v85
    %129 = vmatpush1.msra.mxu0 %v84
    %130 = vmatprep.subr.mxu0 %v89
    %131 = vmatpush1.msra.mxu0 %v88
    %132 = vmatprep.subr.mxu0 %v93
    %133 = vmatpush1.msra.mxu0 %v92
    %134 = vmatprep.subr.mxu0 %v97
    %135 = vmatpush1.msra.mxu0 %v96
    %136 = vmatprep.subr.mxu0 %v101
    %137 = vmatpush1.msra.mxu0 %v100
    %138 = vmatprep.subr.mxu0 %v105
    %139 = vmatpush1.msra.mxu0 %v104
    %140 = vmatprep.subr.mxu0 0.0
    %141 = vmatpush1.msra.mxu0 0.0
    %142 = vmatprep.subr.mxu0 0.0
    %143 = vmatpush1.msra.mxu0 0.0
    %144 = vmatprep.subr.mxu0 0.0
    %145 = vmatpush1.msra.mxu0 0.0
    %146 = vmatprep.subr.mxu0 0.0
    %147 = vmatpush1.msra.mxu0 0.0
    %148 = vmatprep.subr.mxu0 0.0
    %149 = vmatpush1.msra.mxu0 0.0
    %150 = vmatprep.subr.mxu0 0.0
    %151 = vmatpush1.msra.mxu0 0.0
    %152 = vmatprep.subr.mxu0 0.0
    %153 = vmatpush1.msra.mxu0 0.0
    %154 = vmatprep.subr.mxu0 0.0
    %155 = vmatpush1.msra.mxu0 0.0
    %156 = vmatprep.subr.mxu0 0.0
    %157 = vmatpush1.msra.mxu0 0.0
    %158 = vmatprep.subr.mxu0 0.0
    %159 = vmatpush1.msra.mxu0 0.0
    %160 = vmatprep.subr.mxu0 0.0
    %161 = vmatpush1.msra.mxu0 0.0
    %162 = vmatprep.subr.mxu0 0.0
    %163 = vmatpush1.msra.mxu0 0.0
    %164 = vmatprep.subr.mxu0 0.0
    %165 = vmatpush1.msra.mxu0 0.0
    %166 = vmatprep.subr.mxu0 0.0
    %167 = vmatpush1.msra.mxu0 0.0
    %168 = vmatprep.subr.mxu0 0.0
    %169 = vmatpush1.msra.mxu0 0.0
    %170 = vmatprep.subr.mxu0 0.0
    %171 = vmatpush1.msra.mxu0 0.0
    %172 = vmatprep.mubr.f32.mxu0 0.0
    %173 = vmatmul.mubr.f32.gmra.mrb[0].mxu0 %v43
    %v174 = vpop.f32.mrb[0].mxu0
    %v175 = vadd.f32 0.0, %v174
    %v176 = vpop.f32.mrb[0].mxu0
    %v177 = vadd.f32 0.0, %v176
    %178 = vdwg.mxu0
    %179 = vmatprep.subr.mxu0 %v47
    %180 = vmatpush1.msra.mxu0 %v46
    %181 = vmatprep.subr.mxu0 %v51
    %182 = vmatpush1.msra.mxu0 %v50
    %183 = vmatprep.subr.mxu0 %v55
    %184 = vmatpush1.msra.mxu0 %v54
    %185 = vmatprep.subr.mxu0 %v59
    %186 = vmatpush1.msra.mxu0 %v58
    %187 = vmatprep.subr.mxu0 %v63
    %188 = vmatpush1.msra.mxu0 %v62
    %189 = vmatprep.subr.mxu0 %v67
    %190 = vmatpush1.msra.mxu0 %v66
    %191 = vmatprep.subr.mxu0 %v71
    %192 = vmatpush1.msra.mxu0 %v70
    %193 = vmatprep.subr.mxu0 %v75
    %194 = vmatpush1.msra.mxu0 %v74
    %195 = vmatprep.subr.mxu0 %v79
    %196 = vmatpush1.msra.mxu0 %v78
    %197 = vmatprep.subr.mxu0 %v83
    %198 = vmatpush1.msra.mxu0 %v82
    %199 = vmatprep.subr.mxu0 %v87
    %200 = vmatpush1.msra.mxu0 %v86
    %201 = vmatprep.subr.mxu0 %v91
    %202 = vmatpush1.msra.mxu0 %v90
    %203 = vmatprep.subr.mxu0 %v95
    %204 = vmatpush1.msra.mxu0 %v94
    %205 = vmatprep.subr.mxu0 %v99
    %206 = vmatpush1.msra.mxu0 %v98
    %207 = vmatprep.subr.mxu0 %v103
    %208 = vmatpush1.msra.mxu0 %v102
    %209 = vmatprep.subr.mxu0 %v107
    %210 = vmatpush1.msra.mxu0 %v106
    %211 = vmatprep.subr.mxu0 0.0
    %212 = vmatpush1.msra.mxu0 0.0
    %213 = vmatprep.subr.mxu0 0.0
    %214 = vmatpush1.msra.mxu0 0.0
    %215 = vmatprep.subr.mxu0 0.0
    %216 = vmatpush1.msra.mxu0 0.0
    %217 = vmatprep.subr.mxu0 0.0
    %218 = vmatpush1.msra.mxu0 0.0
    %219 = vmatprep.subr.mxu0 0.0
    %220 = vmatpush1.msra.mxu0 0.0
    %221 = vmatprep.subr.mxu0 0.0
    %222 = vmatpush1.msra.mxu0 0.0
    %223 = vmatprep.subr.mxu0 0.0
    %224 = vmatpush1.msra.mxu0 0.0
    %225 = vmatprep.subr.mxu0 0.0
    %226 = vmatpush1.msra.mxu0 0.0
    %227 = vmatprep.subr.mxu0 0.0
    %228 = vmatpush1.msra.mxu0 0.0
    %229 = vmatprep.subr.mxu0 0.0
    %230 = vmatpush1.msra.mxu0 0.0
    %231 = vmatprep.subr.mxu0 0.0
    %232 = vmatpush1.msra.mxu0 0.0
    %233 = vmatprep.subr.mxu0 0.0
    %234 = vmatpush1.msra.mxu0 0.0
    %235 = vmatprep.subr.mxu0 0.0
    %236 = vmatpush1.msra.mxu0 0.0
    %237 = vmatprep.subr.mxu0 0.0
    %238 = vmatpush1.msra.mxu0 0.0
    %239 = vmatprep.subr.mxu0 0.0
    %240 = vmatpush1.msra.mxu0 0.0
    %241 = vmatprep.subr.mxu0 0.0
    %242 = vmatpush1.msra.mxu0 0.0
    %243 = vmatprep.mubr.f32.mxu0 0.0
    %244 = vmatmul.mubr.f32.gmra.mrb[0].mxu0 %v43
    %v245 = vpop.f32.mrb[0].mxu0
    %v246 = vadd.f32 0.0, %v245
    %v247 = vpop.f32.mrb[0].mxu0
    %v248 = vadd.f32 0.0, %v247
    %249 = vdwg.mxu0
    %251 = vrot.lane.b32.xlu0 %v175, 112
    %v252 = vpop.permute.xlu0 %251
    %v254 = vmax.f32 %v175, %v252
    %255 = vrot.lane.b32.xlu0 %v175, 96
    %v256 = vpop.permute.xlu0 %255
    %v258 = vmax.f32 %v254, %v256
    %259 = vrot.lane.b32.xlu0 %v175, 80
    %v260 = vpop.permute.xlu0 %259
    %v262 = vmax.f32 %v258, %v260
    %263 = vrot.lane.b32.xlu0 %v175, 64
    %v264 = vpop.permute.xlu0 %263
    %v266 = vmax.f32 %v262, %v264
    %267 = vrot.lane.b32.xlu0 %v175, 48
    %v268 = vpop.permute.xlu0 %267
    %v270 = vmax.f32 %v266, %v268
    %271 = vrot.lane.b32.xlu0 %v175, 32
    %v272 = vpop.permute.xlu0 %271
    %v274 = vmax.f32 %v270, %v272
    %275 = vrot.lane.b32.xlu0 %v175, 16
    %v276 = vpop.permute.xlu0 %275
    %v278 = vmax.f32 %v274, %v276
    %v279 = vmax.f32 %v278, %v177
    %281 = vrot.lane.b32.xlu0 %v177, 112
    %v282 = vpop.permute.xlu0 %281
    %v284 = vmax.f32 %v279, %v282
    %285 = vrot.lane.b32.xlu0 %v177, 96
    %v286 = vpop.permute.xlu0 %285
    %v288 = vmax.f32 %v284, %v286
    %289 = vrot.lane.b32.xlu0 %v177, 80
    %v290 = vpop.permute.xlu0 %289
    %v292 = vmax.f32 %v288, %v290
    %293 = vrot.lane.b32.xlu0 %v177, 64
    %v294 = vpop.permute.xlu0 %293
    %v296 = vmax.f32 %v292, %v294
    %297 = vrot.lane.b32.xlu0 %v177, 48
    %v298 = vpop.permute.xlu0 %297
    %v300 = vmax.f32 %v296, %v298
    %v301 = vmax.f32 %v177, %v282
    %303 = vrot.lane.b32.xlu0 %v246, 96
    %v304 = vpop.permute.xlu0 %303
    %v306 = vmax.f32 %v301, %v304
    %307 = vrot.lane.b32.xlu0 %v246, 80
    %v308 = vpop.permute.xlu0 %307
    %v310 = vmax.f32 %v306, %v308
    %311 = vrot.lane.b32.xlu0 %v246, 64
    %v312 = vpop.permute.xlu0 %311
    %v314 = vmax.f32 %v310, %v312
    %315 = vrot.lane.b32.xlu0 %v246, 48
    %v316 = vpop.permute.xlu0 %315
    %v318 = vmax.f32 %v314, %v316
    %319 = vrot.lane.b32.xlu0 %v246, 32
    %v320 = vpop.permute.xlu0 %319
    %v322 = vmax.f32 %v318, %v320
    %323 = vrot.lane.b32.xlu0 %v246, 16
    %v324 = vpop.permute.xlu0 %323
    %v326 = vmax.f32 %v322, %v324
    %v327 = vmax.f32 %v326, %v246
    %328 = vrot.lane.b32.xlu0 %v246, 112
    %v329 = vpop.permute.xlu0 %328
    %v331 = vmax.f32 %v327, %v329
    %333 = vrot.lane.b32.xlu0 %v248, 96
    %v334 = vpop.permute.xlu0 %333
    %v336 = vmax.f32 %v331, %v334
    %337 = vrot.lane.b32.xlu0 %v248, 80
    %v338 = vpop.permute.xlu0 %337
    %v340 = vmax.f32 %v336, %v338
    %342 = vrot.lane.b32.xlu0 %v340, 48
    %v343 = vpop.permute.xlu0 %342
    %vm345 = vcmask 130048
    %v346 = vsel %vm345, %v300, %v343
    %vm347 = vcmask 261120
    %v348 = vsel %vm347, %v346, 0.0
    %v349 = vld [vmem:[#allocation5] sm:$0x1]
    %v350 = vlaneseq
    %v351 = vshrl.u32 %v350, 7
    %v352 = vsub.s32 0, %v351
    %v353 = vrot.slane %v349, %v352
    %v354 = vadd.f32 %v348, %v353
    %v355 = vmax.f32 %v354, 0.0
    %v356 = vld [vmem:[#allocation5 + $0x8] sm:$0xff]
    %v357 = vld [vmem:[#allocation5 + $0x10] sm:$0xff]
    %v358 = vld [vmem:[#allocation5 + $0x18] sm:$0xff]
    %v359 = vld [vmem:[#allocation5 + $0x20] sm:$0xff]
    %v360 = vld [vmem:[#allocation5 + $0x28] sm:$0xff]
    %v361 = vld [vmem:[#allocation5 + $0x30] sm:$0xff]
    %v362 = vld [vmem:[#allocation5 + $0x38] sm:$0xff]
    %v363 = vld [vmem:[#allocation5 + $0x40] sm:$0xff]
    %v364 = vld [vmem:[#allocation5 + $0x48] sm:$0xff]
    %v365 = vld [vmem:[#allocation5 + $0x50] sm:$0xff]
    %v366 = vld [vmem:[#allocation5 + $0x58] sm:$0xff]
    %v367 = vld [vmem:[#allocation5 + $0x60] sm:$0xff]
    %v368 = vld [vmem:[#allocation5 + $0x68] sm:$0xff]
    %v369 = vld [vmem:[#allocation5 + $0x70] sm:$0xff]
    %v370 = vld [vmem:[#allocation5 + $0x78] sm:$0xff]
    %v371 = vld [vmem:[#allocation5 + $0x80] sm:$0xff]
    %v372 = vld [vmem:[#allocation5 + $0x88] sm:$0xff]
    %v373 = vld [vmem:[#allocation5 + $0x90] sm:$0xff]
    %v374 = vld [vmem:[#allocation5 + $0x98] sm:$0xff]
    %v375 = vld [vmem:[#allocation5 + $0xa0] sm:$0xff]
    %v376 = vld [vmem:[#allocation5 + $0xa8] sm:$0xff]
    %v377 = vld [vmem:[#allocation5 + $0xb0] sm:$0xff]
    %v378 = vld [vmem:[#allocation5 + $0xb8] sm:$0xff]
    %v379 = vld [vmem:[#allocation5 + $0xc0] sm:$0xff]
    %v380 = vld [vmem:[#allocation5 + $0xc8] sm:$0xff]
    %v381 = vld [vmem:[#allocation5 + $0xd0] sm:$0xff]
    %v382 = vld [vmem:[#allocation5 + $0xd8] sm:$0xff]
    %v383 = vld [vmem:[#allocation5 + $0xe0] sm:$0xff]
    %v384 = vld [vmem:[#allocation5 + $0xe8] sm:$0xff]
    %v385 = vld [vmem:[#allocation5 + $0xf0] sm:$0xff]
    %v386 = vld [vmem:[#allocation5 + $0xf8] sm:$0xff]
    %v387 = vld [vmem:[#allocation5 + $0x100] sm:$0xff]
    %v388 = vld [vmem:[#allocation5 + $0x108] sm:$0x1]
    %v389 = vlaneseq
    %v390 = vshrl.u32 %v389, 7
    %v391 = vsub.s32 0, %v390
    %v392 = vrot.slane %v388, %v391
    %393 = vmatprep.subr.mxu0 0.0
    %394 = vmatpush1.msra.mxu0 %v356
    %395 = vmatprep.subr.mxu0 0.0
    %396 = vmatpush1.msra.mxu0 %v357
    %397 = vmatprep.subr.mxu0 0.0
    %398 = vmatpush1.msra.mxu0 %v358
    %399 = vmatprep.subr.mxu0 0.0
    %400 = vmatpush1.msra.mxu0 %v359
    %401 = vmatprep.subr.mxu0 0.0
    %402 = vmatpush1.msra.mxu0 %v360
    %403 = vmatprep.subr.mxu0 0.0
    %404 = vmatpush1.msra.mxu0 %v361
    %405 = vmatprep.subr.mxu0 0.0
    %406 = vmatpush1.msra.mxu0 %v362
    %407 = vmatprep.subr.mxu0 0.0
    %408 = vmatpush1.msra.mxu0 %v363
    %409 = vmatprep.subr.mxu0 0.0
    %410 = vmatpush1.msra.mxu0 %v364
    %411 = vmatprep.subr.mxu0 0.0
    %412 = vmatpush1.msra.mxu0 %v365
    %413 = vmatprep.subr.mxu0 0.0
    %414 = vmatpush1.msra.mxu0 %v366
    %415 = vmatprep.subr.mxu0 0.0
    %416 = vmatpush1.msra.mxu0 %v367
    %417 = vmatprep.subr.mxu0 0.0
    %418 = vmatpush1.msra.mxu0 %v368
    %419 = vmatprep.subr.mxu0 0.0
    %420 = vmatpush1.msra.mxu0 %v369
    %421 = vmatprep.subr.mxu0 0.0
    %422 = vmatpush1.msra.mxu0 %v370
    %423 = vmatprep.subr.mxu0 0.0
    %424 = vmatpush1.msra.mxu0 %v371
    %425 = vmatprep.subr.mxu0 0.0
    %426 = vmatpush1.msra.mxu0 0.0
    %427 = vmatprep.subr.mxu0 0.0
    %428 = vmatpush1.msra.mxu0 0.0
    %429 = vmatprep.subr.mxu0 0.0
    %430 = vmatpush1.msra.mxu0 0.0
    %431 = vmatprep.subr.mxu0 0.0
    %432 = vmatpush1.msra.mxu0 0.0
    %433 = vmatprep.subr.mxu0 0.0
    %434 = vmatpush1.msra.mxu0 0.0
    %435 = vmatprep.subr.mxu0 0.0
    %436 = vmatpush1.msra.mxu0 0.0
    %437 = vmatprep.subr.mxu0 0.0
    %438 = vmatpush1.msra.mxu0 0.0
    %439 = vmatprep.subr.mxu0 0.0
    %440 = vmatpush1.msra.mxu0 0.0
    %441 = vmatprep.subr.mxu0 0.0
    %442 = vmatpush1.msra.mxu0 0.0
    %443 = vmatprep.subr.mxu0 0.0
    %444 = vmatpush1.msra.mxu0 0.0
    %445 = vmatprep.subr.mxu0 0.0
    %446 = vmatpush1.msra.mxu0 0.0
    %447 = vmatprep.subr.mxu0 0.0
    %448 = vmatpush1.msra.mxu0 0.0
    %449 = vmatprep.subr.mxu0 0.0
    %450 = vmatpush1.msra.mxu0 0.0
    %451 = vmatprep.subr.mxu0 0.0
    %452 = vmatpush1.msra.mxu0 0.0
    %453 = vmatprep.subr.mxu0 0.0
    %454 = vmatpush1.msra.mxu0 0.0
    %455 = vmatprep.subr.mxu0 0.0
    %456 = vmatpush1.msra.mxu0 0.0
    %457 = vmatprep.mubr.f32.mxu0 0.0
    %458 = vmatmul.mubr.f32.gmra.mrb[0].mxu0 %v355
    %v459 = vpop.f32.mrb[0].mxu0
    %v460 = vadd.f32 %v392, %v459
    %v461 = vpop.f32.mrb[0].mxu0
    %462 = vdwg.mxu0
    %463 = vmatprep.subr.mxu0 0.0
    %464 = vmatpush1.msra.mxu0 %v372
    %465 = vmatprep.subr.mxu0 0.0
    %466 = vmatpush1.msra.mxu0 %v373
    %467 = vmatprep.subr.mxu0 0.0
    %468 = vmatpush1.msra.mxu0 %v374
    %469 = vmatprep.subr.mxu0 0.0
    %470 = vmatpush1.msra.mxu0 %v375
    %471 = vmatprep.subr.mxu0 0.0
    %472 = vmatpush1.msra.mxu0 %v376
    %473 = vmatprep.subr.mxu0 0.0
    %474 = vmatpush1.msra.mxu0 %v377
    %475 = vmatprep.subr.mxu0 0.0
    %476 = vmatpush1.msra.mxu0 %v378
    %477 = vmatprep.subr.mxu0 0.0
    %478 = vmatpush1.msra.mxu0 %v379
    %479 = vmatprep.subr.mxu0 0.0
    %480 = vmatpush1.msra.mxu0 %v380
    %481 = vmatprep.subr.mxu0 0.0
    %482 = vmatpush1.msra.mxu0 %v381
    %483 = vmatprep.subr.mxu0 0.0
    %484 = vmatpush1.msra.mxu0 %v382
    %485 = vmatprep.subr.mxu0 0.0
    %486 = vmatpush1.msra.mxu0 %v383
    %487 = vmatprep.subr.mxu0 0.0
    %488 = vmatpush1.msra.mxu0 %v384
    %489 = vmatprep.subr.mxu0 0.0
    %490 = vmatpush1.msra.mxu0 %v385
    %491 = vmatprep.subr.mxu0 0.0
    %492 = vmatpush1.msra.mxu0 %v386
    %493 = vmatprep.subr.mxu0 0.0
    %494 = vmatpush1.msra.mxu0 %v387
    %495 = vmatprep.subr.mxu0 0.0
    %496 = vmatpush1.msra.mxu0 0.0
    %497 = vmatprep.subr.mxu0 0.0
    %498 = vmatpush1.msra.mxu0 0.0
    %499 = vmatprep.subr.mxu0 0.0
    %500 = vmatpush1.msra.mxu0 0.0
    %501 = vmatprep.subr.mxu0 0.0
    %502 = vmatpush1.msra.mxu0 0.0
    %503 = vmatprep.subr.mxu0 0.0
    %504 = vmatpush1.msra.mxu0 0.0
    %505 = vmatprep.subr.mxu0 0.0
    %506 = vmatpush1.msra.mxu0 0.0
    %507 = vmatprep.subr.mxu0 0.0
    %508 = vmatpush1.msra.mxu0 0.0
    %509 = vmatprep.subr.mxu0 0.0
    %510 = vmatpush1.msra.mxu0 0.0
    %511 = vmatprep.subr.mxu0 0.0
    %512 = vmatpush1.msra.mxu0 0.0
    %513 = vmatprep.subr.mxu0 0.0
    %514 = vmatpush1.msra.mxu0 0.0
    %515 = vmatprep.subr.mxu0 0.0
    %516 = vmatpush1.msra.mxu0 0.0
    %517 = vmatprep.subr.mxu0 0.0
    %518 = vmatpush1.msra.mxu0 0.0
    %519 = vmatprep.subr.mxu0 0.0
    %520 = vmatpush1.msra.mxu0 0.0
    %521 = vmatprep.subr.mxu0 0.0
    %522 = vmatpush1.msra.mxu0 0.0
    %523 = vmatprep.subr.mxu0 0.0
    %524 = vmatpush1.msra.mxu0 0.0
    %525 = vmatprep.subr.mxu0 0.0
    %526 = vmatpush1.msra.mxu0 0.0
    %527 = vmatprep.mubr.f32.mxu0 0.0
    %528 = vmatmul.mubr.f32.gmra.mrb[0].mxu0 0.0
    %v529 = vpop.f32.mrb[0].mxu0
    %v530 = vadd.f32 0.0, %v529
    %v531 = vpop.f32.mrb[0].mxu0
    %532 = vdwg.mxu0
    %v533 = vadd.f32 %v460, %v530
    %v534 = vmul.f32 %v533, 0.5
    %v535 = vtanh.pop %v534
    %v536 = vtanh.pop %v533
    %v537 = vadd.f32 %v535, 1.0
    %v538 = vmul.f32 %v537, 0.5
    %539 = vrot.lane.b32.xlu0 %v538, 96
    %v540 = vpop.permute.xlu0 %539
    %541 = vrot.lane.b32.xlu0 %v536, 64
    %v542 = vpop.permute.xlu0 %541
    %543 = vrot.lane.b32.xlu0 %v538, 32
    %v544 = vpop.permute.xlu0 %543
    %v545 = vmul.f32 %v540, 0.0
    %v546 = vmul.f32 %v538, %v542
    %v547 = vadd.f32 %v545, %v546
    %v548 = vtanh.pop %v547
    %v549 = vmul.f32 %v544, %v548
    %550 = vmatprep.subr.mxu0 0.0
    %551 = vmatpush1.msra.mxu0 %v372
    %552 = vmatprep.subr.mxu0 0.0
    %553 = vmatpush1.msra.mxu0 %v373
    %554 = vmatprep.subr.mxu0 0.0
    %555 = vmatpush1.msra.mxu0 %v374
    %556 = vmatprep.subr.mxu0 0.0
    %557 = vmatpush1.msra.mxu0 %v375
    %558 = vmatprep.subr.mxu0 0.0
    %559 = vmatpush1.msra.mxu0 %v376
    %560 = vmatprep.subr.mxu0 0.0
    %561 = vmatpush1.msra.mxu0 %v377
    %562 = vmatprep.subr.mxu0 0.0
    %563 = vmatpush1.msra.mxu0 %v378
    %564 = vmatprep.subr.mxu0 0.0
    %565 = vmatpush1.msra.mxu0 %v379
    %566 = vmatprep.subr.mxu0 0.0
    %567 = vmatpush1.msra.mxu0 %v380
    %568 = vmatprep.subr.mxu0 0.0
    %569 = vmatpush1.msra.mxu0 %v381
    %570 = vmatprep.subr.mxu0 0.0
    %571 = vmatpush1.msra.mxu0 %v382
    %572 = vmatprep.subr.mxu0 0.0
    %573 = vmatpush1.msra.mxu0 %v383
    %574 = vmatprep.subr.mxu0 0.0
    %575 = vmatpush1.msra.mxu0 %v384
    %576 = vmatprep.subr.mxu0 0.0
    %577 = vmatpush1.msra.mxu0 %v385
    %578 = vmatprep.subr.mxu0 0.0
    %579 = vmatpush1.msra.mxu0 %v386
    %580 = vmatprep.subr.mxu0 0.0
    %581 = vmatpush1.msra.mxu0 %v387
    %582 = vmatprep.subr.mxu0 0.0
    %583 = vmatpush1.msra.mxu0 0.0
    %584 = vmatprep.subr.mxu0 0.0
    %585 = vmatpush1.msra.mxu0 0.0
    %586 = vmatprep.subr.mxu0 0.0
    %587 = vmatpush1.msra.mxu0 0.0
    %588 = vmatprep.subr.mxu0 0.0
    %589 = vmatpush1.msra.mxu0 0.0
    %590 = vmatprep.subr.mxu0 0.0
    %591 = vmatpush1.msra.mxu0 0.0
    %592 = vmatprep.subr.mxu0 0.0
    %593 = vmatpush1.msra.mxu0 0.0
    %594 = vmatprep.subr.mxu0 0.0
    %595 = vmatpush1.msra.mxu0 0.0
    %596 = vmatprep.subr.mxu0 0.0
    %597 = vmatpush1.msra.mxu0 0.0
    %598 = vmatprep.subr.mxu0 0.0
    %599 = vmatpush1.msra.mxu0 0.0
    %600 = vmatprep.subr.mxu0 0.0
    %601 = vmatpush1.msra.mxu0 0.0
    %602 = vmatprep.subr.mxu0 0.0
    %603 = vmatpush1.msra.mxu0 0.0
    %604 = vmatprep.subr.mxu0 0.0
    %605 = vmatpush1.msra.mxu0 0.0
    %606 = vmatprep.subr.mxu0 0.0
    %607 = vmatpush1.msra.mxu0 0.0
    %608 = vmatprep.subr.mxu0 0.0
    %609 = vmatpush1.msra.mxu0 0.0
    %610 = vmatprep.subr.mxu0 0.0
    %611 = vmatpush1.msra.mxu0 0.0
    %612 = vmatprep.subr.mxu0 0.0
    %613 = vmatpush1.msra.mxu0 0.0
    %614 = vmatprep.mubr.f32.mxu0 0.0
    %615 = vmatmul.mubr.f32.gmra.mrb[0].mxu0 %v549
    %v616 = vpop.f32.mrb[0].mxu0
    %v617 = vadd.f32 0.0, %v616
    %v618 = vpop.f32.mrb[0].mxu0
    %619 = vdwg.mxu0
    %v621 = vrot.slane %v617, 7
    %v623 = vadd.f32 %v460, %v621
    %v624 = vmul.f32 %v623, 0.5
    %v625 = vtanh.pop %v624
    %v626 = vtanh.pop %v623
    %v627 = vadd.f32 %v625, 1.0
    %v628 = vmul.f32 %v627, 0.5
    %v630 = vrot.slane %v628, 1
    %632 = vrot.lane.b32.xlu0 %v630, 96
    %v633 = vpop.permute.xlu0 %632
    %v635 = vrot.slane %v626, 1
    %637 = vrot.lane.b32.xlu0 %v635, 64
    %v638 = vpop.permute.xlu0 %637
    %639 = vrot.lane.b32.xlu0 %v630, 32
    %v640 = vpop.permute.xlu0 %639
    %v641 = vmul.f32 %v633, %v547
    %v643 = vrot.slane %v638, 7
    %v645 = vmul.f32 %v628, %v643
    %v647 = vrot.slane %v645, 1
    %v649 = vadd.f32 %v641, %v647
    %v650 = vtanh.pop %v649
    %v651 = vmul.f32 %v640, %v650
    %652 = vmatprep.subr.mxu0 0.0
    %653 = vmatpush1.msra.mxu0 %v372
    %654 = vmatprep.subr.mxu0 0.0
    %655 = vmatpush1.msra.mxu0 %v373
    %656 = vmatprep.subr.mxu0 0.0
    %657 = vmatpush1.msra.mxu0 %v374
    %658 = vmatprep.subr.mxu0 0.0
    %659 = vmatpush1.msra.mxu0 %v375
    %660 = vmatprep.subr.mxu0 0.0
    %661 = vmatpush1.msra.mxu0 %v376
    %662 = vmatprep.subr.mxu0 0.0
    %663 = vmatpush1.msra.mxu0 %v377
    %664 = vmatprep.subr.mxu0 0.0
    %665 = vmatpush1.msra.mxu0 %v378
    %666 = vmatprep.subr.mxu0 0.0
    %667 = vmatpush1.msra.mxu0 %v379
    %668 = vmatprep.subr.mxu0 0.0
    %669 = vmatpush1.msra.mxu0 %v380
    %670 = vmatprep.subr.mxu0 0.0
    %671 = vmatpush1.msra.mxu0 %v381
    %672 = vmatprep.subr.mxu0 0.0
    %673 = vmatpush1.msra.mxu0 %v382
    %674 = vmatprep.subr.mxu0 0.0
    %675 = vmatpush1.msra.mxu0 %v383
    %676 = vmatprep.subr.mxu0 0.0
    %677 = vmatpush1.msra.mxu0 %v384
    %678 = vmatprep.subr.mxu0 0.0
    %679 = vmatpush1.msra.mxu0 %v385
    %680 = vmatprep.subr.mxu0 0.0
    %681 = vmatpush1.msra.mxu0 %v386
    %682 = vmatprep.subr.mxu0 0.0
    %683 = vmatpush1.msra.mxu0 %v387
    %684 = vmatprep.subr.mxu0 0.0
    %685 = vmatpush1.msra.mxu0 0.0
    %686 = vmatprep.subr.mxu0 0.0
    %687 = vmatpush1.msra.mxu0 0.0
    %688 = vmatprep.subr.mxu0 0.0
    %689 = vmatpush1.msra.mxu0 0.0
    %690 = vmatprep.subr.mxu0 0.0
    %691 = vmatpush1.msra.mxu0 0.0
    %692 = vmatprep.subr.mxu0 0.0
    %693 = vmatpush1.msra.mxu0 0.0
    %694 = vmatprep.subr.mxu0 0.0
    %695 = vmatpush1.msra.mxu0 0.0
    %696 = vmatprep.subr.mxu0 0.0
    %697 = vmatpush1.msra.mxu0 0.0
    %698 = vmatprep.subr.mxu0 0.0
    %699 = vmatpush1.msra.mxu0 0.0
    %700 = vmatprep.subr.mxu0 0.0
    %701 = vmatpush1.msra.mxu0 0.0
    %702 = vmatprep.subr.mxu0 0.0
    %703 = vmatpush1.msra.mxu0 0.0
    %704 = vmatprep.subr.mxu0 0.0
    %705 = vmatpush1.msra.mxu0 0.0
    %706 = vmatprep.subr.mxu0 0.0
    %707 = vmatpush1.msra.mxu0 0.0
    %708 = vmatprep.subr.mxu0 0.0
    %709 = vmatpush1.msra.mxu0 0.0
    %710 = vmatprep.subr.mxu0 0.0
    %711 = vmatpush1.msra.mxu0 0.0
    %712 = vmatprep.subr.mxu0 0.0
    %713 = vmatpush1.msra.mxu0 0.0
    %714 = vmatprep.subr.mxu0 0.0
    %715 = vmatpush1.msra.mxu0 0.0
    %716 = vmatprep.mubr.f32.mxu0 0.0
    %717 = vmatmul.mubr.f32.gmra.mrb[0].mxu0 %v651
    %v718 = vpop.f32.mrb[0].mxu0
    %v719 = vadd.f32 0.0, %v718
    %v720 = vpop.f32.mrb[0].mxu0
    %721 = vdwg.mxu0
    %v723 = vrot.slane %v719, 6
    %v725 = vadd.f32 %v460, %v723
    %v726 = vmul.f32 %v725, 0.5
    %v727 = vtanh.pop %v726
    %v728 = vtanh.pop %v725
    %v729 = vadd.f32 %v727, 1.0
    %v730 = vmul.f32 %v729, 0.5
    %v732 = vrot.slane %v730, 2
    %734 = vrot.lane.b32.xlu0 %v732, 96
    %v735 = vpop.permute.xlu0 %734
    %v737 = vrot.slane %v728, 2
    %739 = vrot.lane.b32.xlu0 %v737, 64
    %v740 = vpop.permute.xlu0 %739
    %741 = vrot.lane.b32.xlu0 %v732, 32
    %v742 = vpop.permute.xlu0 %741
    %v743 = vmul.f32 %v735, %v649
    %v745 = vrot.slane %v740, 6
    %v747 = vmul.f32 %v730, %v745
    %v749 = vrot.slane %v747, 2
    %v751 = vadd.f32 %v743, %v749
    %v752 = vtanh.pop %v751
    %v753 = vmul.f32 %v742, %v752
    %754 = vmatprep.subr.mxu0 0.0
    %755 = vmatpush1.msra.mxu0 %v372
    %756 = vmatprep.subr.mxu0 0.0
    %757 = vmatpush1.msra.mxu0 %v373
    %758 = vmatprep.subr.mxu0 0.0
    %759 = vmatpush1.msra.mxu0 %v374
    %760 = vmatprep.subr.mxu0 0.0
    %761 = vmatpush1.msra.mxu0 %v375
    %762 = vmatprep.subr.mxu0 0.0
    %763 = vmatpush1.msra.mxu0 %v376
    %764 = vmatprep.subr.mxu0 0.0
    %765 = vmatpush1.msra.mxu0 %v377
    %766 = vmatprep.subr.mxu0 0.0
    %767 = vmatpush1.msra.mxu0 %v378
    %768 = vmatprep.subr.mxu0 0.0
    %769 = vmatpush1.msra.mxu0 %v379
    %770 = vmatprep.subr.mxu0 0.0
    %771 = vmatpush1.msra.mxu0 %v380
    %772 = vmatprep.subr.mxu0 0.0
    %773 = vmatpush1.msra.mxu0 %v381
    %774 = vmatprep.subr.mxu0 0.0
    %775 = vmatpush1.msra.mxu0 %v382
    %776 = vmatprep.subr.mxu0 0.0
    %777 = vmatpush1.msra.mxu0 %v383
    %778 = vmatprep.subr.mxu0 0.0
    %779 = vmatpush1.msra.mxu0 %v384
    %780 = vmatprep.subr.mxu0 0.0
    %781 = vmatpush1.msra.mxu0 %v385
    %782 = vmatprep.subr.mxu0 0.0
    %783 = vmatpush1.msra.mxu0 %v386
    %784 = vmatprep.subr.mxu0 0.0
    %785 = vmatpush1.msra.mxu0 %v387
    %786 = vmatprep.subr.mxu0 0.0
    %787 = vmatpush1.msra.mxu0 0.0
    %788 = vmatprep.subr.mxu0 0.0
    %789 = vmatpush1.msra.mxu0 0.0
    %790 = vmatprep.subr.mxu0 0.0
    %791 = vmatpush1.msra.mxu0 0.0
    %792 = vmatprep.subr.mxu0 0.0
    %793 = vmatpush1.msra.mxu0 0.0
    %794 = vmatprep.subr.mxu0 0.0
    %795 = vmatpush1.msra.mxu0 0.0
    %796 = vmatprep.subr.mxu0 0.0
    %797 = vmatpush1.msra.mxu0 0.0
    %798 = vmatprep.subr.mxu0 0.0
    %799 = vmatpush1.msra.mxu0 0.0
    %800 = vmatprep.subr.mxu0 0.0
    %801 = vmatpush1.msra.mxu0 0.0
    %802 = vmatprep.subr.mxu0 0.0
    %803 = vmatpush1.msra.mxu0 0.0
    %804 = vmatprep.subr.mxu0 0.0
    %805 = vmatpush1.msra.mxu0 0.0
    %806 = vmatprep.subr.mxu0 0.0
    %807 = vmatpush1.msra.mxu0 0.0
    %808 = vmatprep.subr.mxu0 0.0
    %809 = vmatpush1.msra.mxu0 0.0
    %810 = vmatprep.subr.mxu0 0.0
    %811 = vmatpush1.msra.mxu0 0.0
    %812 = vmatprep.subr.mxu0 0.0
    %813 = vmatpush1.msra.mxu0 0.0
    %814 = vmatprep.subr.mxu0 0.0
    %815 = vmatpush1.msra.mxu0 0.0
    %816 = vmatprep.subr.mxu0 0.0
    %817 = vmatpush1.msra.mxu0 0.0
    %818 = vmatprep.mubr.f32.mxu0 0.0
    %819 = vmatmul.mubr.f32.gmra.mrb[0].mxu0 %v753
    %v820 = vpop.f32.mrb[0].mxu0
    %v821 = vadd.f32 0.0, %v820
    %v822 = vpop.f32.mrb[0].mxu0
    %823 = vdwg.mxu0
    %v825 = vrot.slane %v821, 5
    %v827 = vadd.f32 %v460, %v825
    %v828 = vmul.f32 %v827, 0.5
    %v829 = vtanh.pop %v828
    %v830 = vtanh.pop %v827
    %v831 = vadd.f32 %v829, 1.0
    %v832 = vmul.f32 %v831, 0.5
    %v834 = vrot.slane %v832, 3
    %836 = vrot.lane.b32.xlu0 %v834, 96
    %v837 = vpop.permute.xlu0 %836
    %v839 = vrot.slane %v830, 3
    %841 = vrot.lane.b32.xlu0 %v839, 64
    %v842 = vpop.permute.xlu0 %841
    %843 = vrot.lane.b32.xlu0 %v834, 32
    %v844 = vpop.permute.xlu0 %843
    %v845 = vmul.f32 %v837, %v751
    %v847 = vrot.slane %v842, 5
    %v849 = vmul.f32 %v832, %v847
    %v851 = vrot.slane %v849, 3
    %v853 = vadd.f32 %v845, %v851
    %v854 = vtanh.pop %v853
    %v855 = vmul.f32 %v844, %v854
    %v857 = vrot.slane %v651, 7
    %v860 = vrot.slane %v753, 6
    %v863 = vrot.slane %v855, 5
    %vm865 = vcmask 1040384
    %v866 = vsel %vm865, %v549, %v857
    %vm867 = vcmask 1041408
    %v868 = vsel %vm867, %v866, %v860
    %vm869 = vcmask 1042432
    %v870 = vsel %vm869, %v868, %v863
    %v871 = vld [vmem:[#allocation5 + $0x110] sm:$0xff]
    %v872 = vld [vmem:[#allocation5 + $0x118] sm:$0xff]
    %v873 = vld [vmem:[#allocation5 + $0x120] sm:$0xff]
    %v874 = vld [vmem:[#allocation5 + $0x128] sm:$0xff]
    %v875 = vld [vmem:[#allocation5 + $0x130] sm:$0xff]
    %v876 = vld [vmem:[#allocation5 + $0x138] sm:$0xff]
    %v877 = vld [vmem:[#allocation5 + $0x140] sm:$0xff]
    %v878 = vld [vmem:[#allocation5 + $0x148] sm:$0xff]
    %v879 = vld [vmem:[#allocation5 + $0x150] sm:$0xff]
    %v880 = vld [vmem:[#allocation5 + $0x158] sm:$0xff]
    %v881 = vld [vmem:[#allocation5 + $0x160] sm:$0xff]
    %v882 = vld [vmem:[#allocation5 + $0x168] sm:$0xff]
    %v883 = vld [vmem:[#allocation5 + $0x170] sm:$0xff]
    %v884 = vld [vmem:[#allocation5 + $0x178] sm:$0xff]
    %v885 = vld [vmem:[#allocation5 + $0x180] sm:$0xff]
    %v886 = vld [vmem:[#allocation5 + $0x188] sm:$0xff]
    %v887 = vld [vmem:[#allocation5 + $0x190] sm:$0xff]
    %v888 = vld [vmem:[#allocation5 + $0x198] sm:$0xff]
    %v889 = vld [vmem:[#allocation5 + $0x1a0] sm:$0xff]
    %v890 = vld [vmem:[#allocation5 + $0x1a8] sm:$0xff]
    %v891 = vld [vmem:[#allocation5 + $0x1b0] sm:$0xff]
    %v892 = vld [vmem:[#allocation5 + $0x1b8] sm:$0xff]
    %v893 = vld [vmem:[#allocation5 + $0x1c0] sm:$0xff]
    %v894 = vld [vmem:[#allocation5 + $0x1c8] sm:$0xff]
    %v895 = vld [vmem:[#allocation5 + $0x1d0] sm:$0xff]
    %v896 = vld [vmem:[#allocation5 + $0x1d8] sm:$0xff]
    %v897 = vld [vmem:[#allocation5 + $0x1e0] sm:$0xff]
    %v898 = vld [vmem:[#allocation5 + $0x1e8] sm:$0xff]
    %v899 = vld [vmem:[#allocation5 + $0x1f0] sm:$0xff]
    %v900 = vld [vmem:[#allocation5 + $0x1f8] sm:$0xff]
    %v901 = vld [vmem:[#allocation5 + $0x200] sm:$0xff]
    %v902 = vld [vmem:[#allocation5 + $0x208] sm:$0xff]
    %v903 = vld [vmem:[#allocation5 + $0x210] sm:$0x1]
    %v904 = vlaneseq
    %v905 = vshrl.u32 %v904, 7
    %v906 = vsub.s32 0, %v905
    %v907 = vrot.slane %v903, %v906
    %908 = vmatprep.subr.mxu0 0.0
    %909 = vmatpush1.msra.mxu0 %v871
    %910 = vmatprep.subr.mxu0 0.0
    %911 = vmatpush1.msra.mxu0 %v872
    %912 = vmatprep.subr.mxu0 0.0
    %913 = vmatpush1.msra.mxu0 %v873
    %914 = vmatprep.subr.mxu0 0.0
    %915 = vmatpush1.msra.mxu0 %v874
    %916 = vmatprep.subr.mxu0 0.0
    %917 = vmatpush1.msra.mxu0 %v875
    %918 = vmatprep.subr.mxu0 0.0
    %919 = vmatpush1.msra.mxu0 %v876
    %920 = vmatprep.subr.mxu0 0.0
    %921 = vmatpush1.msra.mxu0 %v877
    %922 = vmatprep.subr.mxu0 0.0
    %923 = vmatpush1.msra.mxu0 %v878
    %924 = vmatprep.subr.mxu0 0.0
    %925 = vmatpush1.msra.mxu0 %v879
    %926 = vmatprep.subr.mxu0 0.0
    %927 = vmatpush1.msra.mxu0 %v880
    %928 = vmatprep.subr.mxu0 0.0
    %929 = vmatpush1.msra.mxu0 %v881
    %930 = vmatprep.subr.mxu0 0.0
    %931 = vmatpush1.msra.mxu0 %v882
    %932 = vmatprep.subr.mxu0 0.0
    %933 = vmatpush1.msra.mxu0 %v883
    %934 = vmatprep.subr.mxu0 0.0
    %935 = vmatpush1.msra.mxu0 %v884
    %936 = vmatprep.subr.mxu0 0.0
    %937 = vmatpush1.msra.mxu0 %v885
    %938 = vmatprep.subr.mxu0 0.0
    %939 = vmatpush1.msra.mxu0 %v886
    %940 = vmatprep.subr.mxu0 0.0
    %941 = vmatpush1.msra.mxu0 0.0
    %942 = vmatprep.subr.mxu0 0.0
    %943 = vmatpush1.msra.mxu0 0.0
    %944 = vmatprep.subr.mxu0 0.0
    %945 = vmatpush1.msra.mxu0 0.0
    %946 = vmatprep.subr.mxu0 0.0
    %947 = vmatpush1.msra.mxu0 0.0
    %948 = vmatprep.subr.mxu0 0.0
    %949 = vmatpush1.msra.mxu0 0.0
    %950 = vmatprep.subr.mxu0 0.0
    %951 = vmatpush1.msra.mxu0 0.0
    %952 = vmatprep.subr.mxu0 0.0
    %953 = vmatpush1.msra.mxu0 0.0
    %954 = vmatprep.subr.mxu0 0.0
    %955 = vmatpush1.msra.mxu0 0.0
    %956 = vmatprep.subr.mxu0 0.0
    %957 = vmatpush1.msra.mxu0 0.0
    %958 = vmatprep.subr.mxu0 0.0
    %959 = vmatpush1.msra.mxu0 0.0
    %960 = vmatprep.subr.mxu0 0.0
    %961 = vmatpush1.msra.mxu0 0.0
    %962 = vmatprep.subr.mxu0 0.0
    %963 = vmatpush1.msra.mxu0 0.0
    %964 = vmatprep.subr.mxu0 0.0
    %965 = vmatpush1.msra.mxu0 0.0
    %966 = vmatprep.subr.mxu0 0.0
    %967 = vmatpush1.msra.mxu0 0.0
    %968 = vmatprep.subr.mxu0 0.0
    %969 = vmatpush1.msra.mxu0 0.0
    %970 = vmatprep.subr.mxu0 0.0
    %971 = vmatpush1.msra.mxu0 0.0
    %972 = vmatprep.mubr.f32.mxu0 0.0
    %973 = vmatmul.mubr.f32.gmra.mrb[0].mxu0 %v870
    %v974 = vpop.f32.mrb[0].mxu0
    %v975 = vadd.f32 %v907, %v974
    %v976 = vpop.f32.mrb[0].mxu0
    %977 = vdwg.mxu0
    %978 = vmatprep.subr.mxu0 0.0
    %979 = vmatpush1.msra.mxu0 %v887
    %980 = vmatprep.subr.mxu0 0.0
    %981 = vmatpush1.msra.mxu0 %v888
    %982 = vmatprep.subr.mxu0 0.0
    %983 = vmatpush1.msra.mxu0 %v889
    %984 = vmatprep.subr.mxu0 0.0
    %985 = vmatpush1.msra.mxu0 %v890
    %986 = vmatprep.subr.mxu0 0.0
    %987 = vmatpush1.msra.mxu0 %v891
    %988 = vmatprep.subr.mxu0 0.0
    %989 = vmatpush1.msra.mxu0 %v892
    %990 = vmatprep.subr.mxu0 0.0
    %991 = vmatpush1.msra.mxu0 %v893
    %992 = vmatprep.subr.mxu0 0.0
    %993 = vmatpush1.msra.mxu0 %v894
    %994 = vmatprep.subr.mxu0 0.0
    %995 = vmatpush1.msra.mxu0 %v895
    %996 = vmatprep.subr.mxu0 0.0
    %997 = vmatpush1.msra.mxu0 %v896
    %998 = vmatprep.subr.mxu0 0.0
    %999 = vmatpush1.msra.mxu0 %v897
    %1000 = vmatprep.subr.mxu0 0.0
    %1001 = vmatpush1.msra.mxu0 %v898
    %1002 = vmatprep.subr.mxu0 0.0
    %1003 = vmatpush1.msra.mxu0 %v899
    %1004 = vmatprep.subr.mxu0 0.0
    %1005 = vmatpush1.msra.mxu0 %v900
    %1006 = vmatprep.subr.mxu0 0.0
    %1007 = vmatpush1.msra.mxu0 %v901
    %1008 = vmatprep.subr.mxu0 0.0
    %1009 = vmatpush1.msra.mxu0 %v902
    %1010 = vmatprep.subr.mxu0 0.0
    %1011 = vmatpush1.msra.mxu0 0.0
    %1012 = vmatprep.subr.mxu0 0.0
    %1013 = vmatpush1.msra.mxu0 0.0
    %1014 = vmatprep.subr.mxu0 0.0
    %1015 = vmatpush1.msra.mxu0 0.0
    %1016 = vmatprep.subr.mxu0 0.0
    %1017 = vmatpush1.msra.mxu0 0.0
    %1018 = vmatprep.subr.mxu0 0.0
    %1019 = vmatpush1.msra.mxu0 0.0
    %1020 = vmatprep.subr.mxu0 0.0
    %1021 = vmatpush1.msra.mxu0 0.0
    %1022 = vmatprep.subr.mxu0 0.0
    %1023 = vmatpush1.msra.mxu0 0.0
    %1024 = vmatprep.subr.mxu0 0.0
    %1025 = vmatpush1.msra.mxu0 0.0
    %1026 = vmatprep.subr.mxu0 0.0
    %1027 = vmatpush1.msra.mxu0 0.0
    %1028 = vmatprep.subr.mxu0 0.0
    %1029 = vmatpush1.msra.mxu0 0.0
    %1030 = vmatprep.subr.mxu0 0.0
    %1031 = vmatpush1.msra.mxu0 0.0
    %1032 = vmatprep.subr.mxu0 0.0
    %1033 = vmatpush1.msra.mxu0 0.0
    %1034 = vmatprep.subr.mxu0 0.0
    %1035 = vmatpush1.msra.mxu0 0.0
    %1036 = vmatprep.subr.mxu0 0.0
    %1037 = vmatpush1.msra.mxu0 0.0
    %1038 = vmatprep.subr.mxu0 0.0
    %1039 = vmatpush1.msra.mxu0 0.0
    %1040 = vmatprep.subr.mxu0 0.0
    %1041 = vmatpush1.msra.mxu0 0.0
    %1042 = vmatprep.mubr.f32.mxu0 0.0
    %1043 = vmatmul.mubr.f32.gmra.mrb[0].mxu0 0.0
    %v1044 = vpop.f32.mrb[0].mxu0
    %v1045 = vadd.f32 0.0, %v1044
    %v1046 = vpop.f32.mrb[0].mxu0
    %1047 = vdwg.mxu0
    %v1048 = vadd.f32 %v975, %v1045
    %v1049 = vmul.f32 %v1048, 0.5
    %v1050 = vtanh.pop %v1049
    %v1051 = vtanh.pop %v1048
    %v1052 = vadd.f32 %v1050, 1.0
    %v1053 = vmul.f32 %v1052, 0.5
    %1054 = vrot.lane.b32.xlu0 %v1053, 96
    %v1055 = vpop.permute.xlu0 %1054
    %1056 = vrot.lane.b32.xlu0 %v1051, 64
    %v1057 = vpop.permute.xlu0 %1056
    %1058 = vrot.lane.b32.xlu0 %v1053, 32
    %v1059 = vpop.permute.xlu0 %1058
    %v1060 = vmul.f32 %v1055, 0.0
    %v1061 = vmul.f32 %v1053, %v1057
    %v1062 = vadd.f32 %v1060, %v1061
    %v1063 = vtanh.pop %v1062
    %v1064 = vmul.f32 %v1059, %v1063
    %1065 = vmatprep.subr.mxu0 0.0
    %1066 = vmatpush1.msra.mxu0 %v887
    %1067 = vmatprep.subr.mxu0 0.0
    %1068 = vmatpush1.msra.mxu0 %v888
    %1069 = vmatprep.subr.mxu0 0.0
    %1070 = vmatpush1.msra.mxu0 %v889
    %1071 = vmatprep.subr.mxu0 0.0
    %1072 = vmatpush1.msra.mxu0 %v890
    %1073 = vmatprep.subr.mxu0 0.0
    %1074 = vmatpush1.msra.mxu0 %v891
    %1075 = vmatprep.subr.mxu0 0.0
    %1076 = vmatpush1.msra.mxu0 %v892
    %1077 = vmatprep.subr.mxu0 0.0
    %1078 = vmatpush1.msra.mxu0 %v893
    %1079 = vmatprep.subr.mxu0 0.0
    %1080 = vmatpush1.msra.mxu0 %v894
    %1081 = vmatprep.subr.mxu0 0.0
    %1082 = vmatpush1.msra.mxu0 %v895
    %1083 = vmatprep.subr.mxu0 0.0
    %1084 = vmatpush1.msra.mxu0 %v896
    %1085 = vmatprep.subr.mxu0 0.0
    %1086 = vmatpush1.msra.mxu0 %v897
    %1087 = vmatprep.subr.mxu0 0.0
    %1088 = vmatpush1.msra.mxu0 %v898
    %1089 = vmatprep.subr.mxu0 0.0
    %1090 = vmatpush1.msra.mxu0 %v899
    %1091 = vmatprep.subr.mxu0 0.0
    %1092 = vmatpush1.msra.mxu0 %v900
    %1093 = vmatprep.subr.mxu0 0.0
    %1094 = vmatpush1.msra.mxu0 %v901
    %1095 = vmatprep.subr.mxu0 0.0
    %1096 = vmatpush1.msra.mxu0 %v902
    %1097 = vmatprep.subr.mxu0 0.0
    %1098 = vmatpush1.msra.mxu0 0.0
    %1099 = vmatprep.subr.mxu0 0.0
    %1100 = vmatpush1.msra.mxu0 0.0
    %1101 = vmatprep.subr.mxu0 0.0
    %1102 = vmatpush1.msra.mxu0 0.0
    %1103 = vmatprep.subr.mxu0 0.0
    %1104 = vmatpush1.msra.mxu0 0.0
    %1105 = vmatprep.subr.mxu0 0.0
    %1106 = vmatpush1.msra.mxu0 0.0
    %1107 = vmatprep.subr.mxu0 0.0
    %1108 = vmatpush1.msra.mxu0 0.0
    %1109 = vmatprep.subr.mxu0 0.0
    %1110 = vmatpush1.msra.mxu0 0.0
    %1111 = vmatprep.subr.mxu0 0.0
    %1112 = vmatpush1.msra.mxu0 0.0
    %1113 = vmatprep.subr.mxu0 0.0
    %1114 = vmatpush1.msra.mxu0 0.0
    %1115 = vmatprep.subr.mxu0 0.0
    %1116 = vmatpush1.msra.mxu0 0.0
    %1117 = vmatprep.subr.mxu0 0.0
    %1118 = vmatpush1.msra.mxu0 0.0
    %1119 = vmatprep.subr.mxu0 0.0
    %1120 = vmatpush1.msra.mxu0 0.0
    %1121 = vmatprep.subr.mxu0 0.0
    %1122 = vmatpush1.msra.mxu0 0.0
    %1123 = vmatprep.subr.mxu0 0.0
    %1124 = vmatpush1.msra.mxu0 0.0
    %1125 = vmatprep.subr.mxu0 0.0
    %1126 = vmatpush1.msra.mxu0 0.0
    %1127 = vmatprep.subr.mxu0 0.0
    %1128 = vmatpush1.msra.mxu0 0.0
    %1129 = vmatprep.mubr.f32.mxu0 0.0
    %1130 = vmatmul.mubr.f32.gmra.mrb[0].mxu0 %v1064
    %v1131 = vpop.f32.mrb[0].mxu0
    %v1132 = vadd.f32 0.0, %v1131
    %v1133 = vpop.f32.mrb[0].mxu0
    %1134 = vdwg.mxu0
    %v1136 = vrot.slane %v1132, 7
    %v1138 = vadd.f32 %v975, %v1136
    %v1139 = vmul.f32 %v1138, 0.5
    %v1140 = vtanh.pop %v1139
    %v1141 = vtanh.pop %v1138
    %v1142 = vadd.f32 %v1140, 1.0
    %v1143 = vmul.f32 %v1142, 0.5
    %v1145 = vrot.slane %v1143, 1
    %1147 = vrot.lane.b32.xlu0 %v1145, 96
    %v1148 = vpop.permute.xlu0 %1147
    %v1150 = vrot.slane %v1141, 1
    %1152 = vrot.lane.b32.xlu0 %v1150, 64
    %v1153 = vpop.permute.xlu0 %1152
    %1154 = vrot.lane.b32.xlu0 %v1145, 32
    %v1155 = vpop.permute.xlu0 %1154
    %v1156 = vmul.f32 %v1148, %v1062
    %v1158 = vrot.slane %v1153, 7
    %v1160 = vmul.f32 %v1143, %v1158
    %v1162 = vrot.slane %v1160, 1
    %v1164 = vadd.f32 %v1156, %v1162
    %v1165 = vtanh.pop %v1164
    %v1166 = vmul.f32 %v1155, %v1165
    %1167 = vmatprep.subr.mxu0 0.0
    %1168 = vmatpush1.msra.mxu0 %v887
    %1169 = vmatprep.subr.mxu0 0.0
    %1170 = vmatpush1.msra.mxu0 %v888
    %1171 = vmatprep.subr.mxu0 0.0
    %1172 = vmatpush1.msra.mxu0 %v889
    %1173 = vmatprep.subr.mxu0 0.0
    %1174 = vmatpush1.msra.mxu0 %v890
    %1175 = vmatprep.subr.mxu0 0.0
    %1176 = vmatpush1.msra.mxu0 %v891
    %1177 = vmatprep.subr.mxu0 0.0
    %1178 = vmatpush1.msra.mxu0 %v892
    %1179 = vmatprep.subr.mxu0 0.0
    %1180 = vmatpush1.msra.mxu0 %v893
    %1181 = vmatprep.subr.mxu0 0.0
    %1182 = vmatpush1.msra.mxu0 %v894
    %1183 = vmatprep.subr.mxu0 0.0
    %1184 = vmatpush1.msra.mxu0 %v895
    %1185 = vmatprep.subr.mxu0 0.0
    %1186 = vmatpush1.msra.mxu0 %v896
    %1187 = vmatprep.subr.mxu0 0.0
    %1188 = vmatpush1.msra.mxu0 %v897
    %1189 = vmatprep.subr.mxu0 0.0
    %1190 = vmatpush1.msra.mxu0 %v898
    %1191 = vmatprep.subr.mxu0 0.0
    %1192 = vmatpush1.msra.mxu0 %v899
    %1193 = vmatprep.subr.mxu0 0.0
    %1194 = vmatpush1.msra.mxu0 %v900
    %1195 = vmatprep.subr.mxu0 0.0
    %1196 = vmatpush1.msra.mxu0 %v901
    %1197 = vmatprep.subr.mxu0 0.0
    %1198 = vmatpush1.msra.mxu0 %v902
    %1199 = vmatprep.subr.mxu0 0.0
    %1200 = vmatpush1.msra.mxu0 0.0
    %1201 = vmatprep.subr.mxu0 0.0
    %1202 = vmatpush1.msra.mxu0 0.0
    %1203 = vmatprep.subr.mxu0 0.0
    %1204 = vmatpush1.msra.mxu0 0.0
    %1205 = vmatprep.subr.mxu0 0.0
    %1206 = vmatpush1.msra.mxu0 0.0
    %1207 = vmatprep.subr.mxu0 0.0
    %1208 = vmatpush1.msra.mxu0 0.0
    %1209 = vmatprep.subr.mxu0 0.0
    %1210 = vmatpush1.msra.mxu0 0.0
    %1211 = vmatprep.subr.mxu0 0.0
    %1212 = vmatpush1.msra.mxu0 0.0
    %1213 = vmatprep.subr.mxu0 0.0
    %1214 = vmatpush1.msra.mxu0 0.0
    %1215 = vmatprep.subr.mxu0 0.0
    %1216 = vmatpush1.msra.mxu0 0.0
    %1217 = vmatprep.subr.mxu0 0.0
    %1218 = vmatpush1.msra.mxu0 0.0
    %1219 = vmatprep.subr.mxu0 0.0
    %1220 = vmatpush1.msra.mxu0 0.0
    %1221 = vmatprep.subr.mxu0 0.0
    %1222 = vmatpush1.msra.mxu0 0.0
    %1223 = vmatprep.subr.mxu0 0.0
    %1224 = vmatpush1.msra.mxu0 0.0
    %1225 = vmatprep.subr.mxu0 0.0
    %1226 = vmatpush1.msra.mxu0 0.0
    %1227 = vmatprep.subr.mxu0 0.0
    %1228 = vmatpush1.msra.mxu0 0.0
    %1229 = vmatprep.subr.mxu0 0.0
    %1230 = vmatpush1.msra.mxu0 0.0
    %1231 = vmatprep.mubr.f32.mxu0 0.0
    %1232 = vmatmul.mubr.f32.gmra.mrb[0].mxu0 %v1166
    %v1233 = vpop.f32.mrb[0].mxu0
    %v1234 = vadd.f32 0.0, %v1233
    %v1235 = vpop.f32.mrb[0].mxu0
    %1236 = vdwg.mxu0
    %v1238 = vrot.slane %v1234, 6
    %v1240 = vadd.f32 %v975, %v1238
    %v1241 = vmul.f32 %v1240, 0.5
    %v1242 = vtanh.pop %v1241
    %v1243 = vtanh.pop %v1240
    %v1244 = vadd.f32 %v1242, 1.0
    %v1245 = vmul.f32 %v1244, 0.5
    %v1247 = vrot.slane %v1245, 2
    %1249 = vrot.lane.b32.xlu0 %v1247, 96
    %v1250 = vpop.permute.xlu0 %1249
    %v1252 = vrot.slane %v1243, 2
    %1254 = vrot.lane.b32.xlu0 %v1252, 64
    %v1255 = vpop.permute.xlu0 %1254
    %1256 = vrot.lane.b32.xlu0 %v1247, 32
    %v1257 = vpop.permute.xlu0 %1256
    %v1258 = vmul.f32 %v1250, %v1164
    %v1260 = vrot.slane %v1255, 6
    %v1262 = vmul.f32 %v1245, %v1260
    %v1264 = vrot.slane %v1262, 2
    %v1266 = vadd.f32 %v1258, %v1264
    %v1267 = vtanh.pop %v1266
    %v1268 = vmul.f32 %v1257, %v1267
    %1269 = vmatprep.subr.mxu0 0.0
    %1270 = vmatpush1.msra.mxu0 %v887
    %1271 = vmatprep.subr.mxu0 0.0
    %1272 = vmatpush1.msra.mxu0 %v888
    %1273 = vmatprep.subr.mxu0 0.0
    %1274 = vmatpush1.msra.mxu0 %v889
    %1275 = vmatprep.subr.mxu0 0.0
    %1276 = vmatpush1.msra.mxu0 %v890
    %1277 = vmatprep.subr.mxu0 0.0
    %1278 = vmatpush1.msra.mxu0 %v891
    %1279 = vmatprep.subr.mxu0 0.0
    %1280 = vmatpush1.msra.mxu0 %v892
    %1281 = vmatprep.subr.mxu0 0.0
    %1282 = vmatpush1.msra.mxu0 %v893
    %1283 = vmatprep.subr.mxu0 0.0
    %1284 = vmatpush1.msra.mxu0 %v894
    %1285 = vmatprep.subr.mxu0 0.0
    %1286 = vmatpush1.msra.mxu0 %v895
    %1287 = vmatprep.subr.mxu0 0.0
    %1288 = vmatpush1.msra.mxu0 %v896
    %1289 = vmatprep.subr.mxu0 0.0
    %1290 = vmatpush1.msra.mxu0 %v897
    %1291 = vmatprep.subr.mxu0 0.0
    %1292 = vmatpush1.msra.mxu0 %v898
    %1293 = vmatprep.subr.mxu0 0.0
    %1294 = vmatpush1.msra.mxu0 %v899
    %1295 = vmatprep.subr.mxu0 0.0
    %1296 = vmatpush1.msra.mxu0 %v900
    %1297 = vmatprep.subr.mxu0 0.0
    %1298 = vmatpush1.msra.mxu0 %v901
    %1299 = vmatprep.subr.mxu0 0.0
    %1300 = vmatpush1.msra.mxu0 %v902
    %1301 = vmatprep.subr.mxu0 0.0
    %1302 = vmatpush1.msra.mxu0 0.0
    %1303 = vmatprep.subr.mxu0 0.0
    %1304 = vmatpush1.msra.mxu0 0.0
    %1305 = vmatprep.subr.mxu0 0.0
    %1306 = vmatpush1.msra.mxu0 0.0
    %1307 = vmatprep.subr.mxu0 0.0
    %1308 = vmatpush1.msra.mxu0 0.0
    %1309 = vmatprep.subr.mxu0 0.0
    %1310 = vmatpush1.msra.mxu0 0.0
    %1311 = vmatprep.subr.mxu0 0.0
    %1312 = vmatpush1.msra.mxu0 0.0
    %1313 = vmatprep.subr.mxu0 0.0
    %1314 = vmatpush1.msra.mxu0 0.0
    %1315 = vmatprep.subr.mxu0 0.0
    %1316 = vmatpush1.msra.mxu0 0.0
    %1317 = vmatprep.subr.mxu0 0.0
    %1318 = vmatpush1.msra.mxu0 0.0
    %1319 = vmatprep.subr.mxu0 0.0
    %1320 = vmatpush1.msra.mxu0 0.0
    %1321 = vmatprep.subr.mxu0 0.0
    %1322 = vmatpush1.msra.mxu0 0.0
    %1323 = vmatprep.subr.mxu0 0.0
    %1324 = vmatpush1.msra.mxu0 0.0
    %1325 = vmatprep.subr.mxu0 0.0
    %1326 = vmatpush1.msra.mxu0 0.0
    %1327 = vmatprep.subr.mxu0 0.0
    %1328 = vmatpush1.msra.mxu0 0.0
    %1329 = vmatprep.subr.mxu0 0.0
    %1330 = vmatpush1.msra.mxu0 0.0
    %1331 = vmatprep.subr.mxu0 0.0
    %1332 = vmatpush1.msra.mxu0 0.0
    %1333 = vmatprep.mubr.f32.mxu0 0.0
    %1334 = vmatmul.mubr.f32.gmra.mrb[0].mxu0 %v1268
    %v1335 = vpop.f32.mrb[0].mxu0
    %v1336 = vadd.f32 0.0, %v1335
    %v1337 = vpop.f32.mrb[0].mxu0
    %1338 = vdwg.mxu0
    %v1340 = vrot.slane %v1336, 5
    %v1342 = vadd.f32 %v975, %v1340
    %v1343 = vmul.f32 %v1342, 0.5
    %v1344 = vtanh.pop %v1343
    %v1345 = vtanh.pop %v1342
    %v1346 = vadd.f32 %v1344, 1.0
    %v1347 = vmul.f32 %v1346, 0.5
    %v1349 = vrot.slane %v1347, 3
    %1351 = vrot.lane.b32.xlu0 %v1349, 96
    %v1352 = vpop.permute.xlu0 %1351
    %v1354 = vrot.slane %v1345, 3
    %1356 = vrot.lane.b32.xlu0 %v1354, 64
    %v1357 = vpop.permute.xlu0 %1356
    %1358 = vrot.lane.b32.xlu0 %v1349, 32
    %v1359 = vpop.permute.xlu0 %1358
    %v1360 = vmul.f32 %v1352, %v1266
    %v1362 = vrot.slane %v1357, 5
    %v1364 = vmul.f32 %v1347, %v1362
    %v1366 = vrot.slane %v1364, 3
    %v1368 = vadd.f32 %v1360, %v1366
    %v1369 = vtanh.pop %v1368
    %v1370 = vmul.f32 %v1359, %v1369
    %v1372 = vrot.slane %v1166, 7
    %v1375 = vrot.slane %v1268, 6
    %v1378 = vrot.slane %v1370, 5
    %v1380 = vsel %vm865, %v1064, %v1372
    %v1381 = vsel %vm867, %v1380, %v1375
    %v1382 = vsel %vm869, %v1381, %v1378
    %v1383 = vld [vmem:[#allocation5 + $0x218] sm:$0xff]
    %v1384 = vld [vmem:[#allocation5 + $0x220] sm:$0xff]
    %v1385 = vld [vmem:[#allocation5 + $0x228] sm:$0xff]
    %v1386 = vld [vmem:[#allocation5 + $0x230] sm:$0xff]
    %v1387 = vld [vmem:[#allocation5 + $0x238] sm:$0xff]
    %v1388 = vld [vmem:[#allocation5 + $0x240] sm:$0xff]
    %v1389 = vld [vmem:[#allocation5 + $0x248] sm:$0xff]
    %v1390 = vld [vmem:[#allocation5 + $0x250] sm:$0xff]
    %v1391 = vld [vmem:[#allocation5 + $0x258] sm:$0xff]
    %v1392 = vld [vmem:[#allocation5 + $0x260] sm:$0xff]
    %v1393 = vld [vmem:[#allocation5 + $0x268] sm:$0xff]
    %v1394 = vld [vmem:[#allocation5 + $0x270] sm:$0xff]
    %v1395 = vld [vmem:[#allocation5 + $0x278] sm:$0xff]
    %v1396 = vld [vmem:[#allocation5 + $0x280] sm:$0xff]
    %v1397 = vld [vmem:[#allocation5 + $0x288] sm:$0xff]
    %v1398 = vld [vmem:[#allocation5 + $0x290] sm:$0xff]
    %v1399 = vld [vmem:[#allocation5 + $0x298] sm:$0x1]
    %v1400 = vlaneseq
    %v1401 = vshrl.u32 %v1400, 7
    %v1402 = vsub.s32 0, %v1401
    %v1403 = vrot.slane %v1399, %v1402
    %1404 = vmatprep.subr.mxu0 0.0
    %1405 = vmatpush1.msra.mxu0 %v1383
    %1406 = vmatprep.subr.mxu0 0.0
    %1407 = vmatpush1.msra.mxu0 %v1384
    %1408 = vmatprep.subr.mxu0 0.0
    %1409 = vmatpush1.msra.mxu0 %v1385
    %1410 = vmatprep.subr.mxu0 0.0
    %1411 = vmatpush1.msra.mxu0 %v1386
    %1412 = vmatprep.subr.mxu0 0.0
    %1413 = vmatpush1.msra.mxu0 %v1387
    %1414 = vmatprep.subr.mxu0 0.0
    %1415 = vmatpush1.msra.mxu0 %v1388
    %1416 = vmatprep.subr.mxu0 0.0
    %1417 = vmatpush1.msra.mxu0 %v1389
    %1418 = vmatprep.subr.mxu0 0.0
    %1419 = vmatpush1.msra.mxu0 %v1390
    %1420 = vmatprep.subr.mxu0 0.0
    %1421 = vmatpush1.msra.mxu0 %v1391
    %1422 = vmatprep.subr.mxu0 0.0
    %1423 = vmatpush1.msra.mxu0 %v1392
    %1424 = vmatprep.subr.mxu0 0.0
    %1425 = vmatpush1.msra.mxu0 %v1393
    %1426 = vmatprep.subr.mxu0 0.0
    %1427 = vmatpush1.msra.mxu0 %v1394
    %1428 = vmatprep.subr.mxu0 0.0
    %1429 = vmatpush1.msra.mxu0 %v1395
    %1430 = vmatprep.subr.mxu0 0.0
    %1431 = vmatpush1.msra.mxu0 %v1396
    %1432 = vmatprep.subr.mxu0 0.0
    %1433 = vmatpush1.msra.mxu0 %v1397
    %1434 = vmatprep.subr.mxu0 0.0
    %1435 = vmatpush1.msra.mxu0 %v1398
    %1436 = vmatprep.subr.mxu0 0.0
    %1437 = vmatpush1.msra.mxu0 0.0
    %1438 = vmatprep.subr.mxu0 0.0
    %1439 = vmatpush1.msra.mxu0 0.0
    %1440 = vmatprep.subr.mxu0 0.0
    %1441 = vmatpush1.msra.mxu0 0.0
    %1442 = vmatprep.subr.mxu0 0.0
    %1443 = vmatpush1.msra.mxu0 0.0
    %1444 = vmatprep.subr.mxu0 0.0
    %1445 = vmatpush1.msra.mxu0 0.0
    %1446 = vmatprep.subr.mxu0 0.0
    %1447 = vmatpush1.msra.mxu0 0.0
    %1448 = vmatprep.subr.mxu0 0.0
    %1449 = vmatpush1.msra.mxu0 0.0
    %1450 = vmatprep.subr.mxu0 0.0
    %1451 = vmatpush1.msra.mxu0 0.0
    %1452 = vmatprep.subr.mxu0 0.0
    %1453 = vmatpush1.msra.mxu0 0.0
    %1454 = vmatprep.subr.mxu0 0.0
    %1455 = vmatpush1.msra.mxu0 0.0
    %1456 = vmatprep.subr.mxu0 0.0
    %1457 = vmatpush1.msra.mxu0 0.0
    %1458 = vmatprep.subr.mxu0 0.0
    %1459 = vmatpush1.msra.mxu0 0.0
    %1460 = vmatprep.subr.mxu0 0.0
    %1461 = vmatpush1.msra.mxu0 0.0
    %1462 = vmatprep.subr.mxu0 0.0
    %1463 = vmatpush1.msra.mxu0 0.0
    %1464 = vmatprep.subr.mxu0 0.0
    %1465 = vmatpush1.msra.mxu0 0.0
    %1466 = vmatprep.subr.mxu0 0.0
    %1467 = vmatpush1.msra.mxu0 0.0
    %1468 = vmatprep.mubr.f32.mxu0 0.0
    %1469 = vmatmul.mubr.f32.gmra.mrb[0].mxu0 %v1382
    %v1470 = vpop.f32.mrb[0].mxu0
    %v1471 = vadd.f32 %v1403, %v1470
    %v1472 = vpop.f32.mrb[0].mxu0
    %1473 = vdwg.mxu0
    %vm1474 = vcmask 1043456
    %v1475 = vsel %vm1474, %v1471, -inf
    %1476 = vmax.xlane.f32.xlu0 %v1475
    %v1477 = vpop.xlane.xlu0 %1476
    %v1478 = vsub.f32 %v1471, %v1477
    %v1479 = vmul.f32 %v1478, 1.442695
    %v1480 = vpow.pop %v1479
    %v1481 = vsel %vm1474, %v1480, 0.0
    %1482 = vadd.xlane.f32.xlu0 %v1481
    %v1483 = vpop.xlane.xlu0 %1482
    %v1484 = vrcp.pop %v1483
    %v1485 = vmul.f32 %v1480, %v1484
    %1486 = vst [vmem:[#allocation7] sm:$0xf] %v1485
    // Predicated region
    $region22: #{forward.1} parent=1 // pred_check
      _
    $region23: #{forward.1} parent=1 // pred_check_branch
      %1488 = sbr.rel (0) target = $region25
    $region24: #{forward.1} parent=1 // pred_region
      %s1490 = ssub.s32 64, 64
      %1491 = vsyncadd [#allocation4], %s1490
      %s1493 = sshll.u32 [#allocation7], 4
      %s1494 = int_to_ptr.vmem [resolvable:$true] %s1493
      %1496 = dma.vmem_to_hbm [thread:$0]  %s1494, 64, %s3, [#allocation4]
    $region25: #{forward.1} parent=1 // pred_fallthru
      _
    // Predicated region
    $region26: #{forward.1} parent=1 // pred_check
      _
    $region27: #{forward.1} parent=1 // pred_check_branch
      %1498 = sbr.rel (0) target = $region29
    $region28: #{forward.1} parent=1 // pred_region
      %1499 = dma.done [#allocation4], 64
    $region29: #{forward.1} parent=1 // pred_fallthru
      _
    %1500 = vsyncpa [#allocation3], 1
    %1501 = vsyncpa [#allocation6], 1
    %1502 = vsyncpa [#allocation4], 1

</llo_original>
